<compile_context>
chip_gen: v7x
topology: tpu7x:2x2x1
jax: 0.10.0
libtpu: 0.0.40
codegen_flags: <defaults>
</compile_context>

<pallas_src>
import jax
import jax.numpy as jnp
from jax.experimental import pallas as pl
from jax.experimental.pallas import tpu as pltpu


# ----------------------------------------------------------------------------- #
# Fused decoder kernel: one grid step per 8-row batch block, decode loop inside
# ----------------------------------------------------------------------------- #
def _make_decoder_kernel(Hp, max_len, SOS_token):
    f32, bf16 = jnp.float32, jnp.bfloat16

    def kernel(
        # batch-block inputs
        h0_ref,      # (BB, Hp)     f32  initial hidden state
        enc_ref,     # (BB, S, Hp)  f32  encoder outputs ("values")
        maskb_ref,   # (BB, S)      f32  additive bias: 0 valid / -1e30 padded
        # resident parameters (constant block index)
        emb_ref,                     # (Vp, Hp) bf16  embedding table (padded = 0)
        w1_ref, b1_ref,              # (Hp, Hp) bf16, (1, Hp) f32   attn query proj
        w2_ref, b2_ref,              # (Hp, Hp) bf16, (1, Hp) f32   attn key proj
        v_ref, bv_ref,               # (1, Hp)  f32,  (1, 1)  f32   attn score vector
        wie_ref, wic_ref, wh_ref,    # (Hp, 3Hp) bf16 x3  stacked [r|z|n] GRU weights
        bi_ref, bh_ref,              # (1, 3Hp)  f32 x2   stacked GRU biases
        wout_ref, bout_ref,          # (Hp, Vp) bf16, (1, Vp) f32 (padded cols = -1e30)
        # outputs
        logp_ref,    # (BB, max_len*Vp) f32   per-step log-softmax, (b, t, v) flat
        hout_ref,    # (BB, Hp)         f32   final hidden state
        # VMEM scratch
        h_sc,        # (BB, Hp)          f32
        emb_sc,      # (BB, Hp)          f32  embedding of the fed-back token
        keys_sc,     # (BB, S, Hp)       f32  precomputed enc @ W2 + b2
        stage_sc,    # (max_len, BB, Vp) f32  per-step log-prob staging
    ):
        BB, S, _ = keys_sc.shape
        Vp = wout_ref.shape[1]

        # ---- per-batch-block init: hidden, SOS embedding, step-invariant keys --
        h_sc[...] = h0_ref[...]
        sos_row = emb_ref[SOS_token:SOS_token + 1, :].astype(f32)            # (1, Hp)
        emb_sc[...] = jnp.broadcast_to(sos_row, (BB, Hp))
        enc2d = enc_ref[...].reshape(BB * S, Hp).astype(bf16)                # (BB*S, Hp)
        keys2d = jnp.dot(enc2d, w2_ref[...], preferred_element_type=f32)     # (BB*S, Hp)
        keys_sc[...] = keys2d.reshape(BB, S, Hp) + b2_ref[...][None, :, :]

        def decode_step(t, carry):
            h = h_sc[...]          # (BB, Hp)
            emb = emb_sc[...]      # (BB, Hp)

            # -- Bahdanau attention: V(tanh(W1 q + keys)) + additive mask bias --
            wq = jnp.dot(h.astype(bf16), w1_ref[...],
                         preferred_element_type=f32) + b1_ref[...]           # (BB, Hp)
            tt = jnp.tanh(wq[:, None, :] + keys_sc[...])                     # (BB, S, Hp)
            scores = (jnp.sum(tt * v_ref[...][None, :, :], axis=-1)
                      + bv_ref[...] + maskb_ref[...])                        # (BB, S)
            m = jnp.max(scores, axis=-1, keepdims=True)
            e = jnp.exp(scores - m)
            alphas = e * pl.reciprocal(jnp.sum(e, axis=-1, keepdims=True),
                                       approx=True)                          # (BB, S)
            context = jnp.sum(alphas[:, :, None] * enc_ref[...], axis=1)     # (BB, Hp)

            # -- GRU cell: two stacked gate matmuls, 128-aligned gate slices ----
            gx = (jnp.dot(emb.astype(bf16), wie_ref[...], preferred_element_type=f32)
                  + jnp.dot(context.astype(bf16), wic_ref[...], preferred_element_type=f32)
                  + bi_ref[...])                                             # (BB, 3Hp)
            gh = jnp.dot(h.astype(bf16), wh_ref[...],
                         preferred_element_type=f32) + bh_ref[...]           # (BB, 3Hp)
            r = jax.nn.sigmoid(gx[:, 0:Hp] + gh[:, 0:Hp])
            z = jax.nn.sigmoid(gx[:, Hp:2 * Hp] + gh[:, Hp:2 * Hp])
            n = jnp.tanh(gx[:, 2 * Hp:3 * Hp] + r * gh[:, 2 * Hp:3 * Hp])
            h_new = (1.0 - z) * n + z * h                                    # (BB, Hp)
            h_sc[...] = h_new

            # -- output projection + log_softmax (padded vocab cols at -1e30) ---
            logits = jnp.dot(h_new.astype(bf16), wout_ref[...],
                             preferred_element_type=f32) + bout_ref[...]     # (BB, Vp)
            lm = jnp.max(logits, axis=-1, keepdims=True)
            lse = lm + jnp.log(jnp.sum(jnp.exp(logits - lm), axis=-1, keepdims=True))
            stage_sc[t] = logits - lse                                       # leading-axis store

            # -- greedy next token: argmax -> one-hot -> embedding (MXU) --------
            idx = jax.lax.broadcasted_iota(jnp.int32, (BB, Vp), 1)
            cand = jnp.where(logits >= lm, idx, Vp)
            tok = jnp.min(cand, axis=-1, keepdims=True)                      # (BB, 1)
            onehot = (idx == tok).astype(bf16)                               # (BB, Vp)
            emb_sc[...] = jnp.dot(onehot, emb_ref[...],
                                  preferred_element_type=f32)                # (BB, Hp)
            return carry

        jax.lax.fori_loop(0, max_len, decode_step, 0)

        # ---- copy staged log-probs to the (b, t, v)-flat output: static slices --
        for t in range(max_len):
            logp_ref[:, t * Vp:(t + 1) * Vp] = stage_sc[t]
        hout_ref[...] = h_sc[...]

    return kernel


# ----------------------------------------------------------------------------- #
# Parameter packing / padding helpers
# ----------------------------------------------------------------------------- #
def _pad2(a, rows, cols, fill=0.0):
    out = jnp.full((rows, cols), fill, jnp.float32)
    return out.at[:a.shape[0], :a.shape[1]].set(a.astype(jnp.float32))


def _pack_params(params, Hp, Vp):
    """Pack / pad PyTorch-layout params into kernel-facing, lane-aligned arrays."""
    H = params["w1"].shape[0]
    V = params["w_out"].shape[1]
    f32, bf16 = jnp.float32, jnp.bfloat16

    emb = _pad2(params["embedding"], Vp, Hp).astype(bf16)

    w1 = _pad2(params["w1"], Hp, Hp).astype(bf16)
    b1 = _pad2(params["b1"], 1, Hp)
    w2 = _pad2(params["w2"], Hp, Hp).astype(bf16)
    b2 = _pad2(params["b2"], 1, Hp)
    v = _pad2(params["v"], 1, Hp)
    bv = params["bv"].astype(f32)

    def gates_w(mats):  # 3 matrices, each (rows_in, H) -> (Hp, 3*Hp), 128-aligned gates
        out = jnp.zeros((Hp, 3 * Hp), f32)
        for g, m in enumerate(mats):
            out = out.at[:m.shape[0], g * Hp:g * Hp + H].set(m.astype(f32))
        return out.astype(bf16)

    def gates_b(vecs):  # 3 bias rows, each (1, H) -> (1, 3*Hp)
        out = jnp.zeros((1, 3 * Hp), f32)
        for g, b in enumerate(vecs):
            out = out.at[:, g * Hp:g * Hp + H].set(b.astype(f32))
        return out

    # rows :H of the (2H, H) input-gate matrices act on the embedding half,
    # rows H: act on the attention-context half of the concatenated GRU input.
    wie = gates_w([params["w_ir"][:H], params["w_iz"][:H], params["w_in"][:H]])
    wic = gates_w([params["w_ir"][H:], params["w_iz"][H:], params["w_in"][H:]])
    wh = gates_w([params["w_hr"], params["w_hz"], params["w_hn"]])
    bi = gates_b([params["b_ir"], params["b_iz"], params["b_in"]])
    bh = gates_b([params["b_hr"], params["b_hz"], params["b_hn"]])

    wout = _pad2(params["w_out"], Hp, Vp).astype(bf16)
    bout = jnp.full((1, Vp), -1e30, f32).at[:, :V].set(params["b_out"].astype(f32))

    return (emb, w1, b1, w2, b2, v, bv, wie, wic, wh, bi, bh, wout, bout)


# ----------------------------------------------------------------------------- #
# AttnDecoder.forward (target_tensor=None -> greedy decoding), one pallas_call
# ----------------------------------------------------------------------------- #
def attn_decoder_forward(encoder_outputs, encoder_hidden, input_mask, params,
                         SOS_token=0, max_len=32):
    B, S, H = encoder_outputs.shape
    V = params["w_out"].shape[1]
    BB = 8                                    # batch block (sublane granule)
    Bp = ((B + BB - 1) // BB) * BB
    nb = Bp // BB
    Hp = ((H + 127) // 128) * 128             # lane-pad hidden
    Vp = ((V + 127) // 128) * 128             # lane-pad vocab
    f32 = jnp.float32

    enc_p = jnp.zeros((Bp, S, Hp), f32).at[:B, :, :H].set(encoder_outputs.astype(f32))
    h0_p = jnp.zeros((Bp, Hp), f32).at[:B, :H].set(encoder_hidden[0].astype(f32))
    maskb_p = jnp.full((Bp, S), -1e30, f32).at[:B].set(
        jnp.where(input_mask > 0.5, 0.0, -1e30).astype(f32))

    kparams = _pack_params(params, Hp, Vp)
    kernel = _make_decoder_kernel(Hp, max_len, SOS_token)

    def _batch_spec(shape):
        nd = len(shape)
        return pl.BlockSpec(shape, lambda b, _nd=nd: (b,) + (0,) * (_nd - 1))

    def _const_spec(shape):
        nd = len(shape)
        return pl.BlockSpec(shape, lambda b, _nd=nd: (0,) * _nd)

    in_specs = [
        _batch_spec((BB, Hp)),            # h0
        _batch_spec((BB, S, Hp)),         # encoder outputs
        _batch_spec((BB, S)),             # additive attention mask bias
        _const_spec((Vp, Hp)),            # embedding table
        _const_spec((Hp, Hp)), _const_spec((1, Hp)),       # w1, b1
        _const_spec((Hp, Hp)), _const_spec((1, Hp)),       # w2, b2
        _const_spec((1, Hp)), _const_spec((1, 1)),         # v, bv
        _const_spec((Hp, 3 * Hp)), _const_spec((Hp, 3 * Hp)), _const_spec((Hp, 3 * Hp)),
        _const_spec((1, 3 * Hp)), _const_spec((1, 3 * Hp)),
        _const_spec((Hp, Vp)), _const_spec((1, Vp)),
    ]

    grid_spec = pltpu.PrefetchScalarGridSpec(
        num_scalar_prefetch=0,
        grid=(nb,),                                   # batch blocks; decode loop is inside
        in_specs=in_specs,
        out_specs=(
            pl.BlockSpec((BB, max_len * Vp), lambda b: (b, 0)),   # (b, t, v)-flat log-probs
            pl.BlockSpec((BB, Hp), lambda b: (b, 0)),             # final hidden
        ),
        scratch_shapes=[
            pltpu.VMEM((BB, Hp), jnp.float32),           # hidden carry
            pltpu.VMEM((BB, Hp), jnp.float32),           # fed-back embedding
            pltpu.VMEM((BB, S, Hp), jnp.float32),        # precomputed attention keys
            pltpu.VMEM((max_len, BB, Vp), jnp.float32),  # per-step log-prob staging
        ],
    )

    logp_flat, h_final = pl.pallas_call(
        kernel,
        out_shape=(
            jax.ShapeDtypeStruct((Bp, max_len * Vp), jnp.float32),
            jax.ShapeDtypeStruct((Bp, Hp), jnp.float32),
        ),
        grid_spec=grid_spec,
        compiler_params=pltpu.CompilerParams(
            dimension_semantics=("parallel",),          # batch blocks -> both v7x TCs
            vmem_limit_bytes=64 * 1024 * 1024,
        ),
    )(h0_p, enc_p, maskb_p, *kparams)

    # (Bp, max_len*Vp) -> (Bp, max_len, Vp) is a contiguous reshape (no transpose)
    decoder_outputs = logp_flat.reshape(Bp, max_len, Vp)[:B, :, :V]   # (B, max_len, V)
    decoder_hidden = h_final[:B, :H][None, :, :]                      # (1, B, H)
    return decoder_outputs, decoder_hidden


# ----------------------------------------------------------------------------- #
# Pure-JAX f32 reference (mirrors the PyTorch module) for a step-0 sanity check
# ----------------------------------------------------------------------------- #
def reference_forward(encoder_outputs, encoder_hidden, input_mask, params,
                      SOS_token=0, max_len=8):
    B, S, H = encoder_outputs.shape
    h = encoder_hidden[0]
    tok = jnp.full((B,), SOS_token, jnp.int32)
    outs = []
    for _ in range(max_len):
        emb = params["embedding"][tok]
        wq = h @ params["w1"] + params["b1"]
        wv = jnp.einsum("bsh,hk->bsk", encoder_outputs, params["w2"]) + params["b2"][None]
        t = jnp.tanh(wq[:, None, :] + wv)
        scores = jnp.sum(t * params["v"][None], axis=-1) + params["bv"][0, 0]
        scores = jnp.where(input_mask > 0.5, scores, -jnp.inf)
        alphas = jax.nn.softmax(scores, axis=-1)
        ctx = jnp.einsum("bs,bsh->bh", alphas, encoder_outputs)
        x = jnp.concatenate([emb, ctx], axis=-1)
        r = jax.nn.sigmoid(x @ params["w_ir"] + params["b_ir"] + h @ params["w_hr"] + params["b_hr"])
        z = jax.nn.sigmoid(x @ params["w_iz"] + params["b_iz"] + h @ params["w_hz"] + params["b_hz"])
        n = jnp.tanh(x @ params["w_in"] + params["b_in"] + r * (h @ params["w_hn"] + params["b_hn"]))
        h = (1.0 - z) * n + z * h
        logits = h @ params["w_out"] + params["b_out"]
        outs.append(jax.nn.log_softmax(logits, axis=-1))
        tok = jnp.argmax(logits, axis=-1).astype(jnp.int32)
    return jnp.stack(outs, axis=1), h[None]


# ----------------------------------------------------------------------------- #
# Deterministic parameter construction (shapes follow the PyTorch __init__)
# ----------------------------------------------------------------------------- #
def make_params(key, hidden_size, output_size):
    H, V = hidden_size, output_size
    ks = jax.random.split(key, 16)
    s = 0.1
    return {
        # nn.Embedding(output_size, hidden_size)
        "embedding": s * jax.random.normal(ks[0], (V, H), jnp.float32),
        # BahdanauAttention: W1, W2 (H->H), V (H->1); stored (in, out)
        "w1": s * jax.random.normal(ks[1], (H, H), jnp.float32),
        "b1": s * jax.random.normal(ks[2], (1, H), jnp.float32),
        "w2": s * jax.random.normal(ks[3], (H, H), jnp.float32),
        "b2": s * jax.random.normal(ks[4], (1, H), jnp.float32),
        "v":  s * jax.random.normal(ks[5], (1, H), jnp.float32),
        "bv": s * jax.random.normal(ks[6], (1, 1), jnp.float32),
        # nn.GRU(2H -> H), gate-split transposed weights
        "w_ir": s * jax.random.normal(ks[7], (2 * H, H), jnp.float32),
        "w_iz": s * jax.random.normal(ks[8], (2 * H, H), jnp.float32),
        "w_in": s * jax.random.normal(ks[9], (2 * H, H), jnp.float32),
        "w_hr": s * jax.random.normal(ks[10], (H, H), jnp.float32),
        "w_hz": s * jax.random.normal(ks[11], (H, H), jnp.float32),
        "w_hn": s * jax.random.normal(ks[12], (H, H), jnp.float32),
        "b_ir": jnp.full((1, H), 0.01, jnp.float32),
        "b_iz": jnp.full((1, H), 0.02, jnp.float32),
        "b_in": jnp.full((1, H), 0.03, jnp.float32),
        "b_hr": jnp.full((1, H), 0.01, jnp.float32),
        "b_hz": jnp.full((1, H), 0.02, jnp.float32),
        "b_hn": jnp.full((1, H), 0.03, jnp.float32),
        # nn.Linear(hidden_size, output_size)
        "w_out": s * jax.random.normal(ks[13], (H, V), jnp.float32),
        "b_out": s * jax.random.normal(ks[14], (1, V), jnp.float32),
    }


if __name__ == "__main__":
    B, S, H, V, MAX_LEN = 2, 8, 32, 16, 8

    key = jax.random.PRNGKey(0)
    k_params, k_enc, k_hid = jax.random.split(key, 3)

    params = make_params(k_params, hidden_size=H, output_size=V)

    encoder_outputs = jax.random.normal(k_enc, (B, S, H), jnp.float32)
    encoder_hidden = jax.random.normal(k_hid, (1, B, H), jnp.float32)
    lengths = jnp.array([S, 5], dtype=jnp.int32)            # second sequence is padded
    input_mask = (jnp.arange(S)[None, :] < lengths[:, None]).astype(jnp.float32)  # (B, S)

    decoder_outputs, decoder_hidden = attn_decoder_forward(
        encoder_outputs, encoder_hidden, input_mask, params,
        SOS_token=0, max_len=MAX_LEN)
    jax.block_until_ready((decoder_outputs, decoder_hidden))

    # sanity checks: shapes, finiteness, valid log-probabilities
    assert decoder_outputs.shape == (B, MAX_LEN, V)
    assert decoder_hidden.shape == (1, B, H)
    assert bool(jnp.all(jnp.isfinite(decoder_outputs)))
    assert bool(jnp.all(jnp.isfinite(decoder_hidden)))
    probs_sum = jnp.sum(jnp.exp(decoder_outputs), axis=-1)
    assert bool(jnp.all(jnp.abs(probs_sum - 1.0) < 1e-3))

    # step-0 numerical check vs. pure-JAX f32 reference (step 0 is independent of
    # the greedy-feedback path, so bf16-matmul differences stay tiny)
    ref_out, _ = reference_forward(encoder_outputs, encoder_hidden, input_mask,
                                   params, SOS_token=0, max_len=1)
    max_err = jnp.max(jnp.abs(decoder_outputs[:, 0, :] - ref_out[:, 0, :]))
    assert bool(max_err < 0.1), f"step-0 mismatch vs reference: {max_err}"

    print("KERNEL_OK")
</pallas_src>

<mosaic_0001>
module attributes {stable_mosaic.version = 11 : i64} {
  func.func @kernel(%arg0: i32, %arg1: memref<8x128xf32, #tpu.memory_space<vmem>>, %arg2: memref<8x8x128xf32, #tpu.memory_space<vmem>>, %arg3: memref<8x8xf32, #tpu.memory_space<vmem>>, %arg4: memref<128x128xbf16, #tpu.memory_space<vmem>>, %arg5: memref<128x128xbf16, #tpu.memory_space<vmem>>, %arg6: memref<1x128xf32, #tpu.memory_space<vmem>>, %arg7: memref<128x128xbf16, #tpu.memory_space<vmem>>, %arg8: memref<1x128xf32, #tpu.memory_space<vmem>>, %arg9: memref<1x128xf32, #tpu.memory_space<vmem>>, %arg10: memref<1x1xf32, #tpu.memory_space<vmem>>, %arg11: memref<128x384xbf16, #tpu.memory_space<vmem>>, %arg12: memref<128x384xbf16, #tpu.memory_space<vmem>>, %arg13: memref<128x384xbf16, #tpu.memory_space<vmem>>, %arg14: memref<1x384xf32, #tpu.memory_space<vmem>>, %arg15: memref<1x384xf32, #tpu.memory_space<vmem>>, %arg16: memref<128x128xbf16, #tpu.memory_space<vmem>>, %arg17: memref<1x128xf32, #tpu.memory_space<vmem>>, %arg18: memref<8x1024xf32, #tpu.memory_space<vmem>>, %arg19: memref<8x128xf32, #tpu.memory_space<vmem>>, %arg20: memref<8x128xf32, #tpu.memory_space<vmem>>, %arg21: memref<8x128xf32, #tpu.memory_space<vmem>>, %arg22: memref<8x8x128xf32, #tpu.memory_space<vmem>>, %arg23: memref<8x8x128xf32, #tpu.memory_space<vmem>>) attributes {dimension_semantics = [#tpu.dimension_semantics<parallel>], iteration_bounds = array<i64: 1>, scalar_prefetch = 0 : i64, scratch_operands = 4 : i64, tpu.core_type = #tpu.core_type<tc>, window_params = [{transform_indices = @transform_0, window_bounds = array<i64: 8, 128>}, {transform_indices = @transform_1, window_bounds = array<i64: 8, 8, 128>}, {transform_indices = @transform_2, window_bounds = array<i64: 8, 8>}, {pipeline_mode = #tpu.pipeline_mode<synchronous>, transform_indices = @transform_3, window_bounds = array<i64: 128, 128>}, {pipeline_mode = #tpu.pipeline_mode<synchronous>, transform_indices = @transform_4, window_bounds = array<i64: 128, 128>}, {pipeline_mode = #tpu.pipeline_mode<synchronous>, transform_indices = @transform_5, window_bounds = array<i64: 1, 128>}, {pipeline_mode = #tpu.pipeline_mode<synchronous>, transform_indices = @transform_6, window_bounds = array<i64: 128, 128>}, {pipeline_mode = #tpu.pipeline_mode<synchronous>, transform_indices = @transform_7, window_bounds = array<i64: 1, 128>}, {pipeline_mode = #tpu.pipeline_mode<synchronous>, transform_indices = @transform_8, window_bounds = array<i64: 1, 128>}, {pipeline_mode = #tpu.pipeline_mode<synchronous>, transform_indices = @transform_9, window_bounds = array<i64: 1, 1>}, {pipeline_mode = #tpu.pipeline_mode<synchronous>, transform_indices = @transform_10, window_bounds = array<i64: 128, 384>}, {pipeline_mode = #tpu.pipeline_mode<synchronous>, transform_indices = @transform_11, window_bounds = array<i64: 128, 384>}, {pipeline_mode = #tpu.pipeline_mode<synchronous>, transform_indices = @transform_12, window_bounds = array<i64: 128, 384>}, {pipeline_mode = #tpu.pipeline_mode<synchronous>, transform_indices = @transform_13, window_bounds = array<i64: 1, 384>}, {pipeline_mode = #tpu.pipeline_mode<synchronous>, transform_indices = @transform_14, window_bounds = array<i64: 1, 384>}, {pipeline_mode = #tpu.pipeline_mode<synchronous>, transform_indices = @transform_15, window_bounds = array<i64: 128, 128>}, {pipeline_mode = #tpu.pipeline_mode<synchronous>, transform_indices = @transform_16, window_bounds = array<i64: 1, 128>}, {transform_indices = @transform_17, window_bounds = array<i64: 8, 1024>}, {transform_indices = @transform_18, window_bounds = array<i64: 8, 128>}]} {
    %c0 = arith.constant 0 : index
    %c0_0 = arith.constant 0 : index
    %0 = vector.load %arg1[%c0, %c0_0] : memref<8x128xf32, #tpu.memory_space<vmem>>, vector<8x128xf32>
    %c0_1 = arith.constant 0 : index
    %c0_2 = arith.constant 0 : index
    %1 = vector.load %arg20[%c0_1, %c0_2] : memref<8x128xf32, #tpu.memory_space<vmem>>, vector<8x128xf32>
    tpu.vector_store %arg20[%c0_1, %c0_2], %0 {strides = array<i32>} : memref<8x128xf32, #tpu.memory_space<vmem>>, vector<8x128xf32>,
    %c0_3 = arith.constant 0 : index
    %c0_4 = arith.constant 0 : index
    %2 = vector.load %arg4[%c0_3, %c0_4] : memref<128x128xbf16, #tpu.memory_space<vmem>>, vector<1x128xbf16>
    %3 = arith.extf %2 : vector<1x128xbf16> to vector<1x128xf32>
    %4 = vector.shape_cast %3 : vector<1x128xf32> to vector<1x128xf32>
    %5 = vector.broadcast %4 : vector<1x128xf32> to vector<8x128xf32>
    %c0_5 = arith.constant 0 : index
    %c0_6 = arith.constant 0 : index
    %6 = vector.load %arg21[%c0_5, %c0_6] : memref<8x128xf32, #tpu.memory_space<vmem>>, vector<8x128xf32>
    tpu.vector_store %arg21[%c0_5, %c0_6], %5 {strides = array<i32>} : memref<8x128xf32, #tpu.memory_space<vmem>>, vector<8x128xf32>,
    %c0_7 = arith.constant 0 : index
    %c0_8 = arith.constant 0 : index
    %c0_9 = arith.constant 0 : index
    %7 = vector.load %arg2[%c0_7, %c0_8, %c0_9] : memref<8x8x128xf32, #tpu.memory_space<vmem>>, vector<8x8x128xf32>
    %8 = vector.shape_cast %7 : vector<8x8x128xf32> to vector<64x128xf32>
    %9 = arith.truncf %8 : vector<64x128xf32> to vector<64x128xbf16>
    %c0_10 = arith.constant 0 : index
    %c0_11 = arith.constant 0 : index
    %10 = vector.load %arg7[%c0_10, %c0_11] : memref<128x128xbf16, #tpu.memory_space<vmem>>, vector<128x128xbf16>
    %cst = arith.constant dense<0.000000e+00> : vector<64x128xf32>
    %11 = tpu.matmul %9, %10, %cst {dimension_numbers = #tpu.dot_dimension_numbers<[1], [0], [0], [1], [0, 0, 1, 1], [], []>} : vector<64x128xbf16>, vector<128x128xbf16>, vector<64x128xf32> -> vector<64x128xf32>
    %12 = vector.shape_cast %11 : vector<64x128xf32> to vector<8x8x128xf32>
    %c0_12 = arith.constant 0 : index
    %c0_13 = arith.constant 0 : index
    %13 = vector.load %arg8[%c0_12, %c0_13] : memref<1x128xf32, #tpu.memory_space<vmem>>, vector<1x128xf32>
    %14 = vector.shape_cast %13 : vector<1x128xf32> to vector<1x1x128xf32>
    %15 = vector.broadcast %14 : vector<1x1x128xf32> to vector<8x8x128xf32>
    %16 = arith.addf %12, %15 : vector<8x8x128xf32>
    %c0_14 = arith.constant 0 : index
    %c0_15 = arith.constant 0 : index
    %c0_16 = arith.constant 0 : index
    %17 = vector.load %arg22[%c0_14, %c0_15, %c0_16] : memref<8x8x128xf32, #tpu.memory_space<vmem>>, vector<8x8x128xf32>
    tpu.vector_store %arg22[%c0_14, %c0_15, %c0_16], %16 {strides = array<i32>} : memref<8x8x128xf32, #tpu.memory_space<vmem>>, vector<8x8x128xf32>,
    %c0_i32 = arith.constant 0 : i32
    %c8_i32 = arith.constant 8 : i32
    %18 = arith.addi %c0_i32, %c8_i32 : i32
    %c1_i32 = arith.constant 1 : i32
    scf.for %arg24 = %c0_i32 to %18 step %c1_i32  : i32 {
      %c0_48 = arith.constant 0 : index
      %c0_49 = arith.constant 0 : index
      %45 = vector.load %arg20[%c0_48, %c0_49] : memref<8x128xf32, #tpu.memory_space<vmem>>, vector<8x128xf32>
      %c0_50 = arith.constant 0 : index
      %c0_51 = arith.constant 0 : index
      %46 = vector.load %arg21[%c0_50, %c0_51] : memref<8x128xf32, #tpu.memory_space<vmem>>, vector<8x128xf32>
      %47 = arith.truncf %45 : vector<8x128xf32> to vector<8x128xbf16>
      %c0_52 = arith.constant 0 : index
      %c0_53 = arith.constant 0 : index
      %48 = vector.load %arg5[%c0_52, %c0_53] : memref<128x128xbf16, #tpu.memory_space<vmem>>, vector<128x128xbf16>
      %cst_54 = arith.constant dense<0.000000e+00> : vector<8x128xf32>
      %49 = tpu.matmul %47, %48, %cst_54 {dimension_numbers = #tpu.dot_dimension_numbers<[1], [0], [0], [1], [0, 0, 1, 1], [], []>} : vector<8x128xbf16>, vector<128x128xbf16>, vector<8x128xf32> -> vector<8x128xf32>
      %c0_55 = arith.constant 0 : index
      %c0_56 = arith.constant 0 : index
      %50 = vector.load %arg6[%c0_55, %c0_56] : memref<1x128xf32, #tpu.memory_space<vmem>>, vector<1x128xf32>
      %51 = vector.broadcast %50 : vector<1x128xf32> to vector<8x128xf32>
      %52 = arith.addf %49, %51 : vector<8x128xf32>
      %53 = vector.shape_cast %52 : vector<8x128xf32> to vector<8x1x128xf32>
      %c0_57 = arith.constant 0 : index
      %c0_58 = arith.constant 0 : index
      %c0_59 = arith.constant 0 : index
      %54 = vector.load %arg22[%c0_57, %c0_58, %c0_59] : memref<8x8x128xf32, #tpu.memory_space<vmem>>, vector<8x8x128xf32>
      %55 = vector.broadcast %53 : vector<8x1x128xf32> to vector<8x8x128xf32>
      %56 = arith.addf %55, %54 : vector<8x8x128xf32>
      %57 = math.tanh %56 : vector<8x8x128xf32>
      %c0_60 = arith.constant 0 : index
      %c0_61 = arith.constant 0 : index
      %58 = vector.load %arg9[%c0_60, %c0_61] : memref<1x128xf32, #tpu.memory_space<vmem>>, vector<1x128xf32>
      %59 = vector.shape_cast %58 : vector<1x128xf32> to vector<1x1x128xf32>
      %60 = vector.broadcast %59 : vector<1x1x128xf32> to vector<8x8x128xf32>
      %61 = arith.mulf %57, %60 : vector<8x8x128xf32>
      %cst_62 = arith.constant dense<0.000000e+00> : vector<8x8xf32>
      %62 = vector.multi_reduction <add>, %61, %cst_62 [2] : vector<8x8x128xf32> to vector<8x8xf32>
      %c0_63 = arith.constant 0 : index
      %c0_64 = arith.constant 0 : index
      %63 = vector.load %arg10[%c0_63, %c0_64] : memref<1x1xf32, #tpu.memory_space<vmem>>, vector<1x1xf32>
      %64 = vector.broadcast %63 : vector<1x1xf32> to vector<8x8xf32>
      %65 = arith.addf %62, %64 : vector<8x8xf32>
      %c0_65 = arith.constant 0 : index
      %c0_66 = arith.constant 0 : index
      %66 = vector.load %arg3[%c0_65, %c0_66] : memref<8x8xf32, #tpu.memory_space<vmem>>, vector<8x8xf32>
      %67 = arith.addf %65, %66 : vector<8x8xf32>
      %cst_67 = arith.constant dense<0xFF800000> : vector<8xf32>
      %68 = vector.multi_reduction <maximumf>, %67, %cst_67 [1] : vector<8x8xf32> to vector<8xf32>
      %69 = vector.shape_cast %68 : vector<8xf32> to vector<8x1xf32>
      %70 = vector.broadcast %69 : vector<8x1xf32> to vector<8x8xf32>
      %71 = arith.subf %67, %70 : vector<8x8xf32>
      %72 = math.exp %71 : vector<8x8xf32>
      %cst_68 = arith.constant dense<0.000000e+00> : vector<8xf32>
      %73 = vector.multi_reduction <add>, %72, %cst_68 [1] : vector<8x8xf32> to vector<8xf32>
      %74 = vector.shape_cast %73 : vector<8xf32> to vector<8x1xf32>
      %75 = tpu.reciprocal %74 {approx = true} : vector<8x1xf32> -> vector<8x1xf32>
      %76 = vector.broadcast %75 : vector<8x1xf32> to vector<8x8xf32>
      %77 = arith.mulf %72, %76 : vector<8x8xf32>
      %78 = vector.shape_cast %77 : vector<8x8xf32> to vector<8x8x1xf32>
      %c0_69 = arith.constant 0 : index
      %c0_70 = arith.constant 0 : index
      %c0_71 = arith.constant 0 : index
      %79 = vector.load %arg2[%c0_69, %c0_70, %c0_71] : memref<8x8x128xf32, #tpu.memory_space<vmem>>, vector<8x8x128xf32>
      %80 = vector.broadcast %78 : vector<8x8x1xf32> to vector<8x8x128xf32>
      %81 = arith.mulf %80, %79 : vector<8x8x128xf32>
      %cst_72 = arith.constant dense<0.000000e+00> : vector<8x128xf32>
      %82 = vector.multi_reduction <add>, %81, %cst_72 [1] : vector<8x8x128xf32> to vector<8x128xf32>
      %83 = arith.truncf %46 : vector<8x128xf32> to vector<8x128xbf16>
      %c0_73 = arith.constant 0 : index
      %c0_74 = arith.constant 0 : index
      %84 = vector.load %arg11[%c0_73, %c0_74] : memref<128x384xbf16, #tpu.memory_space<vmem>>, vector<128x384xbf16>
      %cst_75 = arith.constant dense<0.000000e+00> : vector<8x384xf32>
      %85 = tpu.matmul %83, %84, %cst_75 {dimension_numbers = #tpu.dot_dimension_numbers<[1], [0], [0], [1], [0, 0, 1, 1], [], []>} : vector<8x128xbf16>, vector<128x384xbf16>, vector<8x384xf32> -> vector<8x384xf32>
      %86 = arith.truncf %82 : vector<8x128xf32> to vector<8x128xbf16>
      %c0_76 = arith.constant 0 : index
      %c0_77 = arith.constant 0 : index
      %87 = vector.load %arg12[%c0_76, %c0_77] : memref<128x384xbf16, #tpu.memory_space<vmem>>, vector<128x384xbf16>
      %cst_78 = arith.constant dense<0.000000e+00> : vector<8x384xf32>
      %88 = tpu.matmul %86, %87, %cst_78 {dimension_numbers = #tpu.dot_dimension_numbers<[1], [0], [0], [1], [0, 0, 1, 1], [], []>} : vector<8x128xbf16>, vector<128x384xbf16>, vector<8x384xf32> -> vector<8x384xf32>
      %89 = arith.addf %85, %88 : vector<8x384xf32>
      %c0_79 = arith.constant 0 : index
      %c0_80 = arith.constant 0 : index
      %90 = vector.load %arg14[%c0_79, %c0_80] : memref<1x384xf32, #tpu.memory_space<vmem>>, vector<1x384xf32>
      %91 = vector.broadcast %90 : vector<1x384xf32> to vector<8x384xf32>
      %92 = arith.addf %89, %91 : vector<8x384xf32>
      %93 = arith.truncf %45 : vector<8x128xf32> to vector<8x128xbf16>
      %c0_81 = arith.constant 0 : index
      %c0_82 = arith.constant 0 : index
      %94 = vector.load %arg13[%c0_81, %c0_82] : memref<128x384xbf16, #tpu.memory_space<vmem>>, vector<128x384xbf16>
      %cst_83 = arith.constant dense<0.000000e+00> : vector<8x384xf32>
      %95 = tpu.matmul %93, %94, %cst_83 {dimension_numbers = #tpu.dot_dimension_numbers<[1], [0], [0], [1], [0, 0, 1, 1], [], []>} : vector<8x128xbf16>, vector<128x384xbf16>, vector<8x384xf32> -> vector<8x384xf32>
      %c0_84 = arith.constant 0 : index
      %c0_85 = arith.constant 0 : index
      %96 = vector.load %arg15[%c0_84, %c0_85] : memref<1x384xf32, #tpu.memory_space<vmem>>, vector<1x384xf32>
      %97 = vector.broadcast %96 : vector<1x384xf32> to vector<8x384xf32>
      %98 = arith.addf %95, %97 : vector<8x384xf32>
      %99 = vector.extract_strided_slice %92 {offsets = [0, 0], sizes = [8, 128], strides = [1, 1]} : vector<8x384xf32> to vector<8x128xf32>
      %100 = vector.extract_strided_slice %98 {offsets = [0, 0], sizes = [8, 128], strides = [1, 1]} : vector<8x384xf32> to vector<8x128xf32>
      %101 = arith.addf %99, %100 : vector<8x128xf32>
      %102 = arith.negf %101 : vector<8x128xf32>
      %103 = math.exp %102 : vector<8x128xf32>
      %cst_86 = arith.constant 1.000000e+00 : f32
      %104 = vector.broadcast %cst_86 : f32 to vector<8x128xf32>
      %105 = arith.addf %104, %103 : vector<8x128xf32>
      %106 = arith.divf %104, %105 : vector<8x128xf32>
      %107 = vector.extract_strided_slice %92 {offsets = [0, 128], sizes = [8, 128], strides = [1, 1]} : vector<8x384xf32> to vector<8x128xf32>
      %108 = vector.extract_strided_slice %98 {offsets = [0, 128], sizes = [8, 128], strides = [1, 1]} : vector<8x384xf32> to vector<8x128xf32>
      %109 = arith.addf %107, %108 : vector<8x128xf32>
      %110 = arith.negf %109 : vector<8x128xf32>
      %111 = math.exp %110 : vector<8x128xf32>
      %cst_87 = arith.constant 1.000000e+00 : f32
      %112 = vector.broadcast %cst_87 : f32 to vector<8x128xf32>
      %113 = arith.addf %112, %111 : vector<8x128xf32>
      %114 = arith.divf %112, %113 : vector<8x128xf32>
      %115 = vector.extract_strided_slice %92 {offsets = [0, 256], sizes = [8, 128], strides = [1, 1]} : vector<8x384xf32> to vector<8x128xf32>
      %116 = vector.extract_strided_slice %98 {offsets = [0, 256], sizes = [8, 128], strides = [1, 1]} : vector<8x384xf32> to vector<8x128xf32>
      %117 = arith.mulf %106, %116 : vector<8x128xf32>
      %118 = arith.addf %115, %117 : vector<8x128xf32>
      %119 = math.tanh %118 : vector<8x128xf32>
      %cst_88 = arith.constant 1.000000e+00 : f32
      %120 = vector.broadcast %cst_88 : f32 to vector<8x128xf32>
      %121 = arith.subf %120, %114 : vector<8x128xf32>
      %122 = arith.mulf %121, %119 : vector<8x128xf32>
      %123 = arith.mulf %114, %45 : vector<8x128xf32>
      %124 = arith.addf %122, %123 : vector<8x128xf32>
      %c0_89 = arith.constant 0 : index
      %c0_90 = arith.constant 0 : index
      %125 = vector.load %arg20[%c0_89, %c0_90] : memref<8x128xf32, #tpu.memory_space<vmem>>, vector<8x128xf32>
      tpu.vector_store %arg20[%c0_89, %c0_90], %124 {strides = array<i32>} : memref<8x128xf32, #tpu.memory_space<vmem>>, vector<8x128xf32>,
      %126 = arith.truncf %124 : vector<8x128xf32> to vector<8x128xbf16>
      %c0_91 = arith.constant 0 : index
      %c0_92 = arith.constant 0 : index
      %127 = vector.load %arg16[%c0_91, %c0_92] : memref<128x128xbf16, #tpu.memory_space<vmem>>, vector<128x128xbf16>
      %cst_93 = arith.constant dense<0.000000e+00> : vector<8x128xf32>
      %128 = tpu.matmul %126, %127, %cst_93 {dimension_numbers = #tpu.dot_dimension_numbers<[1], [0], [0], [1], [0, 0, 1, 1], [], []>} : vector<8x128xbf16>, vector<128x128xbf16>, vector<8x128xf32> -> vector<8x128xf32>
      %c0_94 = arith.constant 0 : index
      %c0_95 = arith.constant 0 : index
      %129 = vector.load %arg17[%c0_94, %c0_95] : memref<1x128xf32, #tpu.memory_space<vmem>>, vector<1x128xf32>
      %130 = vector.broadcast %129 : vector<1x128xf32> to vector<8x128xf32>
      %131 = arith.addf %128, %130 : vector<8x128xf32>
      %cst_96 = arith.constant dense<0xFF800000> : vector<8xf32>
      %132 = vector.multi_reduction <maximumf>, %131, %cst_96 [1] : vector<8x128xf32> to vector<8xf32>
      %133 = vector.shape_cast %132 : vector<8xf32> to vector<8x1xf32>
      %134 = vector.broadcast %133 : vector<8x1xf32> to vector<8x128xf32>
      %135 = arith.subf %131, %134 : vector<8x128xf32>
      %136 = math.exp %135 : vector<8x128xf32>
      %cst_97 = arith.constant dense<0.000000e+00> : vector<8xf32>
      %137 = vector.multi_reduction <add>, %136, %cst_97 [1] : vector<8x128xf32> to vector<8xf32>
      %138 = vector.shape_cast %137 : vector<8xf32> to vector<8x1xf32>
      %139 = math.log %138 : vector<8x1xf32>
      %140 = arith.addf %133, %139 : vector<8x1xf32>
      %141 = vector.broadcast %140 : vector<8x1xf32> to vector<8x128xf32>
      %142 = arith.subf %131, %141 : vector<8x128xf32>
      %143 = arith.index_cast %arg24 : i32 to index
      %c0_98 = arith.constant 0 : index
      %c0_99 = arith.constant 0 : index
      %144 = vector.load %arg23[%143, %c0_98, %c0_99] : memref<8x8x128xf32, #tpu.memory_space<vmem>>, vector<1x8x128xf32>
      %145 = vector.shape_cast %144 : vector<1x8x128xf32> to vector<8x128xf32>
      %146 = vector.shape_cast %142 : vector<8x128xf32> to vector<1x8x128xf32>
      tpu.vector_store %arg23[%143, %c0_98, %c0_99], %146 {strides = array<i32>} : memref<8x8x128xf32, #tpu.memory_space<vmem>>, vector<1x8x128xf32>,
      %147 = tpu.iota {dimensions = array<i32: 1>} : vector<8x128xi32>
      %148 = vector.broadcast %133 : vector<8x1xf32> to vector<8x128xf32>
      %149 = arith.cmpf oge, %131, %148 : vector<8x128xf32>
      %c128_i32 = arith.constant 128 : i32
      %150 = vector.broadcast %c128_i32 : i32 to vector<8x128xi32>
      %151 = arith.select %149, %147, %150 : vector<8x128xi1>, vector<8x128xi32>
      %cst_100 = arith.constant dense<2147483647> : vector<8xi32>
      %152 = vector.multi_reduction <minsi>, %151, %cst_100 [1] : vector<8x128xi32> to vector<8xi32>
      %153 = vector.shape_cast %152 : vector<8xi32> to vector<8x1xi32>
      %154 = vector.broadcast %153 : vector<8x1xi32> to vector<8x128xi32>
      %155 = arith.cmpi eq, %147, %154 : vector<8x128xi32>
      %156 = arith.extui %155 : vector<8x128xi1> to vector<8x128xi32>
      %157 = arith.sitofp %156 : vector<8x128xi32> to vector<8x128xf32>
      %158 = arith.truncf %157 : vector<8x128xf32> to vector<8x128xbf16>
      %c0_101 = arith.constant 0 : index
      %c0_102 = arith.constant 0 : index
      %159 = vector.load %arg4[%c0_101, %c0_102] : memref<128x128xbf16, #tpu.memory_space<vmem>>, vector<128x128xbf16>
      %cst_103 = arith.constant dense<0.000000e+00> : vector<8x128xf32>
      %160 = tpu.matmul %158, %159, %cst_103 {dimension_numbers = #tpu.dot_dimension_numbers<[1], [0], [0], [1], [0, 0, 1, 1], [], []>} : vector<8x128xbf16>, vector<128x128xbf16>, vector<8x128xf32> -> vector<8x128xf32>
      %c0_104 = arith.constant 0 : index
      %c0_105 = arith.constant 0 : index
      %161 = vector.load %arg21[%c0_104, %c0_105] : memref<8x128xf32, #tpu.memory_space<vmem>>, vector<8x128xf32>
      tpu.vector_store %arg21[%c0_104, %c0_105], %160 {strides = array<i32>} : memref<8x128xf32, #tpu.memory_space<vmem>>, vector<8x128xf32>,
    }
    %c8_i32_17 = arith.constant 8 : i32
    %c0_18 = arith.constant 0 : index
    %c0_19 = arith.constant 0 : index
    %c0_20 = arith.constant 0 : index
    %19 = vector.load %arg23[%c0_18, %c0_19, %c0_20] : memref<8x8x128xf32, #tpu.memory_space<vmem>>, vector<1x8x128xf32>
    %20 = vector.shape_cast %19 : vector<1x8x128xf32> to vector<8x128xf32>
    %c0_21 = arith.constant 0 : index
    %c0_22 = arith.constant 0 : index
    %21 = vector.load %arg18[%c0_21, %c0_22] : memref<8x1024xf32, #tpu.memory_space<vmem>>, vector<8x128xf32>
    tpu.vector_store %arg18[%c0_21, %c0_22], %20 {strides = array<i32>} : memref<8x1024xf32, #tpu.memory_space<vmem>>, vector<8x128xf32>,
    %c1 = arith.constant 1 : index
    %c0_23 = arith.constant 0 : index
    %c0_24 = arith.constant 0 : index
    %22 = vector.load %arg23[%c1, %c0_23, %c0_24] : memref<8x8x128xf32, #tpu.memory_space<vmem>>, vector<1x8x128xf32>
    %23 = vector.shape_cast %22 : vector<1x8x128xf32> to vector<8x128xf32>
    %c0_25 = arith.constant 0 : index
    %c128 = arith.constant 128 : index
    %24 = vector.load %arg18[%c0_25, %c128] : memref<8x1024xf32, #tpu.memory_space<vmem>>, vector<8x128xf32>
    tpu.vector_store %arg18[%c0_25, %c128], %23 {strides = array<i32>} : memref<8x1024xf32, #tpu.memory_space<vmem>>, vector<8x128xf32>,
    %c2 = arith.constant 2 : index
    %c0_26 = arith.constant 0 : index
    %c0_27 = arith.constant 0 : index
    %25 = vector.load %arg23[%c2, %c0_26, %c0_27] : memref<8x8x128xf32, #tpu.memory_space<vmem>>, vector<1x8x128xf32>
    %26 = vector.shape_cast %25 : vector<1x8x128xf32> to vector<8x128xf32>
    %c0_28 = arith.constant 0 : index
    %c256 = arith.constant 256 : index
    %27 = vector.load %arg18[%c0_28, %c256] : memref<8x1024xf32, #tpu.memory_space<vmem>>, vector<8x128xf32>
    tpu.vector_store %arg18[%c0_28, %c256], %26 {strides = array<i32>} : memref<8x1024xf32, #tpu.memory_space<vmem>>, vector<8x128xf32>,
    %c3 = arith.constant 3 : index
    %c0_29 = arith.constant 0 : index
    %c0_30 = arith.constant 0 : index
    %28 = vector.load %arg23[%c3, %c0_29, %c0_30] : memref<8x8x128xf32, #tpu.memory_space<vmem>>, vector<1x8x128xf32>
    %29 = vector.shape_cast %28 : vector<1x8x128xf32> to vector<8x128xf32>
    %c0_31 = arith.constant 0 : index
    %c384 = arith.constant 384 : index
    %30 = vector.load %arg18[%c0_31, %c384] : memref<8x1024xf32, #tpu.memory_space<vmem>>, vector<8x128xf32>
    tpu.vector_store %arg18[%c0_31, %c384], %29 {strides = array<i32>} : memref<8x1024xf32, #tpu.memory_space<vmem>>, vector<8x128xf32>,
    %c4 = arith.constant 4 : index
    %c0_32 = arith.constant 0 : index
    %c0_33 = arith.constant 0 : index
    %31 = vector.load %arg23[%c4, %c0_32, %c0_33] : memref<8x8x128xf32, #tpu.memory_space<vmem>>, vector<1x8x128xf32>
    %32 = vector.shape_cast %31 : vector<1x8x128xf32> to vector<8x128xf32>
    %c0_34 = arith.constant 0 : index
    %c512 = arith.constant 512 : index
    %33 = vector.load %arg18[%c0_34, %c512] : memref<8x1024xf32, #tpu.memory_space<vmem>>, vector<8x128xf32>
    tpu.vector_store %arg18[%c0_34, %c512], %32 {strides = array<i32>} : memref<8x1024xf32, #tpu.memory_space<vmem>>, vector<8x128xf32>,
    %c5 = arith.constant 5 : index
    %c0_35 = arith.constant 0 : index
    %c0_36 = arith.constant 0 : index
    %34 = vector.load %arg23[%c5, %c0_35, %c0_36] : memref<8x8x128xf32, #tpu.memory_space<vmem>>, vector<1x8x128xf32>
    %35 = vector.shape_cast %34 : vector<1x8x128xf32> to vector<8x128xf32>
    %c0_37 = arith.constant 0 : index
    %c640 = arith.constant 640 : index
    %36 = vector.load %arg18[%c0_37, %c640] : memref<8x1024xf32, #tpu.memory_space<vmem>>, vector<8x128xf32>
    tpu.vector_store %arg18[%c0_37, %c640], %35 {strides = array<i32>} : memref<8x1024xf32, #tpu.memory_space<vmem>>, vector<8x128xf32>,
    %c6 = arith.constant 6 : index
    %c0_38 = arith.constant 0 : index
    %c0_39 = arith.constant 0 : index
    %37 = vector.load %arg23[%c6, %c0_38, %c0_39] : memref<8x8x128xf32, #tpu.memory_space<vmem>>, vector<1x8x128xf32>
    %38 = vector.shape_cast %37 : vector<1x8x128xf32> to vector<8x128xf32>
    %c0_40 = arith.constant 0 : index
    %c768 = arith.constant 768 : index
    %39 = vector.load %arg18[%c0_40, %c768] : memref<8x1024xf32, #tpu.memory_space<vmem>>, vector<8x128xf32>
    tpu.vector_store %arg18[%c0_40, %c768], %38 {strides = array<i32>} : memref<8x1024xf32, #tpu.memory_space<vmem>>, vector<8x128xf32>,
    %c7 = arith.constant 7 : index
    %c0_41 = arith.constant 0 : index
    %c0_42 = arith.constant 0 : index
    %40 = vector.load %arg23[%c7, %c0_41, %c0_42] : memref<8x8x128xf32, #tpu.memory_space<vmem>>, vector<1x8x128xf32>
    %41 = vector.shape_cast %40 : vector<1x8x128xf32> to vector<8x128xf32>
    %c0_43 = arith.constant 0 : index
    %c896 = arith.constant 896 : index
    %42 = vector.load %arg18[%c0_43, %c896] : memref<8x1024xf32, #tpu.memory_space<vmem>>, vector<8x128xf32>
    tpu.vector_store %arg18[%c0_43, %c896], %41 {strides = array<i32>} : memref<8x1024xf32, #tpu.memory_space<vmem>>, vector<8x128xf32>,
    %c0_44 = arith.constant 0 : index
    %c0_45 = arith.constant 0 : index
    %43 = vector.load %arg20[%c0_44, %c0_45] : memref<8x128xf32, #tpu.memory_space<vmem>>, vector<8x128xf32>
    %c0_46 = arith.constant 0 : index
    %c0_47 = arith.constant 0 : index
    %44 = vector.load %arg19[%c0_46, %c0_47] : memref<8x128xf32, #tpu.memory_space<vmem>>, vector<8x128xf32>
    tpu.vector_store %arg19[%c0_46, %c0_47], %43 {strides = array<i32>} : memref<8x128xf32, #tpu.memory_space<vmem>>, vector<8x128xf32>,
    return
  }
  func.func @transform_0(%arg0: i32) -> (i32, i32) {
    %c0_i32 = arith.constant 0 : i32
    %c0_i32_0 = arith.constant 0 : i32
    return %arg0, %c0_i32 : i32, i32
  }
  func.func @transform_1(%arg0: i32) -> (i32, i32, i32) {
    %c0_i32 = arith.constant 0 : i32
    %c0_i32_0 = arith.constant 0 : i32
    %c0_i32_1 = arith.constant 0 : i32
    return %arg0, %c0_i32, %c0_i32_0 : i32, i32, i32
  }
  func.func @transform_2(%arg0: i32) -> (i32, i32) {
    %c0_i32 = arith.constant 0 : i32
    %c0_i32_0 = arith.constant 0 : i32
    return %arg0, %c0_i32 : i32, i32
  }
  func.func @transform_3(%arg0: i32) -> (i32, i32) {
    %c0_i32 = arith.constant 0 : i32
    %c0_i32_0 = arith.constant 0 : i32
    %c0_i32_1 = arith.constant 0 : i32
    return %c0_i32, %c0_i32_0 : i32, i32
  }
  func.func @transform_4(%arg0: i32) -> (i32, i32) {
    %c0_i32 = arith.constant 0 : i32
    %c0_i32_0 = arith.constant 0 : i32
    %c0_i32_1 = arith.constant 0 : i32
    return %c0_i32, %c0_i32_0 : i32, i32
  }
  func.func @transform_5(%arg0: i32) -> (i32, i32) {
    %c0_i32 = arith.constant 0 : i32
    %c0_i32_0 = arith.constant 0 : i32
    %c0_i32_1 = arith.constant 0 : i32
    return %c0_i32, %c0_i32_0 : i32, i32
  }
  func.func @transform_6(%arg0: i32) -> (i32, i32) {
    %c0_i32 = arith.constant 0 : i32
    %c0_i32_0 = arith.constant 0 : i32
    %c0_i32_1 = arith.constant 0 : i32
    return %c0_i32, %c0_i32_0 : i32, i32
  }
  func.func @transform_7(%arg0: i32) -> (i32, i32) {
    %c0_i32 = arith.constant 0 : i32
    %c0_i32_0 = arith.constant 0 : i32
    %c0_i32_1 = arith.constant 0 : i32
    return %c0_i32, %c0_i32_0 : i32, i32
  }
  func.func @transform_8(%arg0: i32) -> (i32, i32) {
    %c0_i32 = arith.constant 0 : i32
    %c0_i32_0 = arith.constant 0 : i32
    %c0_i32_1 = arith.constant 0 : i32
    return %c0_i32, %c0_i32_0 : i32, i32
  }
  func.func @transform_9(%arg0: i32) -> (i32, i32) {
    %c0_i32 = arith.constant 0 : i32
    %c0_i32_0 = arith.constant 0 : i32
    %c0_i32_1 = arith.constant 0 : i32
    return %c0_i32, %c0_i32_0 : i32, i32
  }
  func.func @transform_10(%arg0: i32) -> (i32, i32) {
    %c0_i32 = arith.constant 0 : i32
    %c0_i32_0 = arith.constant 0 : i32
    %c0_i32_1 = arith.constant 0 : i32
    return %c0_i32, %c0_i32_0 : i32, i32
  }
  func.func @transform_11(%arg0: i32) -> (i32, i32) {
    %c0_i32 = arith.constant 0 : i32
    %c0_i32_0 = arith.constant 0 : i32
    %c0_i32_1 = arith.constant 0 : i32
    return %c0_i32, %c0_i32_0 : i32, i32
  }
  func.func @transform_12(%arg0: i32) -> (i32, i32) {
    %c0_i32 = arith.constant 0 : i32
    %c0_i32_0 = arith.constant 0 : i32
    %c0_i32_1 = arith.constant 0 : i32
    return %c0_i32, %c0_i32_0 : i32, i32
  }
  func.func @transform_13(%arg0: i32) -> (i32, i32) {
    %c0_i32 = arith.constant 0 : i32
    %c0_i32_0 = arith.constant 0 : i32
    %c0_i32_1 = arith.constant 0 : i32
    return %c0_i32, %c0_i32_0 : i32, i32
  }
  func.func @transform_14(%arg0: i32) -> (i32, i32) {
    %c0_i32 = arith.constant 0 : i32
    %c0_i32_0 = arith.constant 0 : i32
    %c0_i32_1 = arith.constant 0 : i32
    return %c0_i32, %c0_i32_0 : i32, i32
  }
  func.func @transform_15(%arg0: i32) -> (i32, i32) {
    %c0_i32 = arith.constant 0 : i32
    %c0_i32_0 = arith.constant 0 : i32
    %c0_i32_1 = arith.constant 0 : i32
    return %c0_i32, %c0_i32_0 : i32, i32
  }
  func.func @transform_16(%arg0: i32) -> (i32, i32) {
    %c0_i32 = arith.constant 0 : i32
    %c0_i32_0 = arith.constant 0 : i32
    %c0_i32_1 = arith.constant 0 : i32
    return %c0_i32, %c0_i32_0 : i32, i32
  }
  func.func @transform_17(%arg0: i32) -> (i32, i32) {
    %c0_i32 = arith.constant 0 : i32
    %c0_i32_0 = arith.constant 0 : i32
    return %arg0, %c0_i32 : i32, i32
  }
  func.func @transform_18(%arg0: i32) -> (i32, i32) {
    %c0_i32 = arith.constant 0 : i32
    %c0_i32_0 = arith.constant 0 : i32
    return %arg0, %c0_i32 : i32, i32
  }
}

</mosaic_0001>

<llo_original>
// kernel: tpu_custom_call.1
$region0: #{tpu_custom_call.1}
  #allocation0 [shape = 'u32[]', space=smem, size = 0x4, offset = 0x4, fixed_abs, tag = 'smem constant byte address 0x4 - core index']
  #allocation1 [shape = 'u32[144,128]{1,0:T(1,128)}', space=vmem, size = 0x12000, scoped, tag = 'internal scratch']
  #allocation2 [shape = 'f32[8,128]{1,0:T(8,128)}', space=vmem, size = 0x1000, scoped, tag = 'scratch operand']
  #allocation3 [shape = 'f32[8,128]{1,0:T(8,128)}', space=vmem, size = 0x1000, scoped, tag = 'scratch operand']
  #allocation4 [shape = 'f32[8,8,128]{2,1,0:T(8,128)}', space=vmem, size = 0x8000, scoped, tag = 'scratch operand']
  #allocation5 [shape = 'f32[8,8,128]{2,1,0:T(8,128)}', space=vmem, size = 0x8000, scoped, tag = 'scratch operand']
  #allocation6 [shape = 'f32[1,1]{1,0:T(1,128)S(1)}', space=vmem, size = 0x200, scoped, tag = 'scoped memory for tpu_custom_call.1']
  %s0 = inlined_call_operand.hbm [shape: f32[8,128], index: 0, kind: input, shape index: {}]
  %s1 = inlined_call_operand.hbm [shape: f32[8,8,128], index: 1, kind: input, shape index: {}]
  %s2 = inlined_call_operand.hbm [shape: f32[8,8], index: 2, kind: input, shape index: {}]
  %s3 = inlined_call_operand.hbm [shape: bf16[128,128], index: 3, kind: input, shape index: {}]
  %s4 = inlined_call_operand.hbm [shape: bf16[128,128], index: 4, kind: input, shape index: {}]
  %s5 = inlined_call_operand.hbm [shape: f32[1,128], index: 5, kind: input, shape index: {}]
  %s6 = inlined_call_operand.hbm [shape: bf16[128,128], index: 6, kind: input, shape index: {}]
  %s7 = inlined_call_operand.hbm [shape: f32[1,128], index: 7, kind: input, shape index: {}]
  %s8 = inlined_call_operand.hbm [shape: f32[1,128], index: 8, kind: input, shape index: {}]
  %s9 = inlined_call_operand.<no memory space> [shape: f32[1,1], index: 9, kind: input, shape index: {}]
  %s10 = inlined_call_operand.hbm [shape: bf16[128,384], index: 10, kind: input, shape index: {}]
  %s11 = inlined_call_operand.hbm [shape: bf16[128,384], index: 11, kind: input, shape index: {}]
  %s12 = inlined_call_operand.hbm [shape: bf16[128,384], index: 12, kind: input, shape index: {}]
  %s13 = inlined_call_operand.hbm [shape: f32[1,384], index: 13, kind: input, shape index: {}]
  %s14 = inlined_call_operand.hbm [shape: f32[1,384], index: 14, kind: input, shape index: {}]
  %s15 = inlined_call_operand.hbm [shape: bf16[128,128], index: 15, kind: input, shape index: {}]
  %s16 = inlined_call_operand.hbm [shape: f32[1,128], index: 16, kind: input, shape index: {}]
  %s17 = inlined_call_operand.hbm [shape: f32[8,1024], index: 17, kind: output, shape index: {0}]
  %s18 = inlined_call_operand.hbm [shape: f32[8,128], index: 18, kind: output, shape index: {1}]
  %19 = xla_tuple %s17, %s18
  %s20 = sld [smem:[#allocation0]]
  $region157: #{tpu_custom_call.1} parent=0
    _
  %s22 = ssub.s32 1, %s20
  %s23 = scalar_select 0, %s22, %s20
  %v24 = vstv %s9
  %25 = vst [vmem:[#allocation6] sm:$0x1] %v24
  $region1: #{tpu_custom_call.1} parent=0
    #allocation7 [shape = 'u8[4096]{0}', space=vmem, size = 0x1000, scoped, tag = 'input window, operand 0, single buffered']
    #allocation8 [shape = 's32[1]{0}', space=sflag, size = 0x4, scoped, tag = 'scoped memory for tpu_custom_call.1']
    #allocation9 [shape = 's32[1]{0}', space=sflag, size = 0x4, scoped, tag = 'scoped memory for tpu_custom_call.1']
    #allocation10 [shape = 'u8[32768]{0}', space=vmem, size = 0x8000, scoped, tag = 'input window, operand 1, single buffered']
    #allocation11 [shape = 's32[1]{0}', space=sflag, size = 0x4, scoped, tag = 'scoped memory for tpu_custom_call.1']
    #allocation12 [shape = 'u8[4096]{0}', space=vmem, size = 0x1000, scoped, tag = 'input window, operand 2, single buffered']
    #allocation13 [shape = 'u8[32768]{0}', space=vmem, size = 0x8000, scoped, tag = 'input window, operand 3, single buffered']
    #allocation14 [shape = 's32[1]{0}', space=sflag, size = 0x4, scoped, tag = 'scoped memory for tpu_custom_call.1']
    #allocation15 [shape = 'u8[32768]{0}', space=vmem, size = 0x8000, scoped, tag = 'input window, operand 4, single buffered']
    #allocation16 [shape = 'u8[512]{0}', space=vmem, size = 0x400, scoped, tag = 'input window, operand 5, single buffered']
    #allocation17 [shape = 's32[1]{0}', space=sflag, size = 0x4, scoped, tag = 'scoped memory for tpu_custom_call.1']
    #allocation18 [shape = 'u8[32768]{0}', space=vmem, size = 0x8000, scoped, tag = 'input window, operand 6, single buffered']
    #allocation19 [shape = 'u8[512]{0}', space=vmem, size = 0x400, scoped, tag = 'input window, operand 7, single buffered']
    #allocation20 [shape = 's32[1]{0}', space=sflag, size = 0x4, scoped, tag = 'scoped memory for tpu_custom_call.1']
    #allocation21 [shape = 'u8[512]{0}', space=vmem, size = 0x400, scoped, tag = 'input window, operand 8, single buffered']
    #allocation22 [shape = 'u8[98304]{0}', space=vmem, size = 0x18000, scoped, tag = 'input window, operand 10, single buffered']
    #allocation23 [shape = 's32[1]{0}', space=sflag, size = 0x4, scoped, tag = 'scoped memory for tpu_custom_call.1']
    #allocation24 [shape = 'u8[98304]{0}', space=vmem, size = 0x18000, scoped, tag = 'input window, operand 11, single buffered']
    #allocation25 [shape = 'u8[98304]{0}', space=vmem, size = 0x18000, scoped, tag = 'input window, operand 12, single buffered']
    #allocation26 [shape = 's32[1]{0}', space=sflag, size = 0x4, scoped, tag = 'scoped memory for tpu_custom_call.1']
    #allocation27 [shape = 'u8[1536]{0}', space=vmem, size = 0x800, scoped, tag = 'input window, operand 13, single buffered']
    #allocation28 [shape = 'u8[1536]{0}', space=vmem, size = 0x800, scoped, tag = 'input window, operand 14, single buffered']
    #allocation29 [shape = 's32[1]{0}', space=sflag, size = 0x4, scoped, tag = 'scoped memory for tpu_custom_call.1']
    #allocation30 [shape = 'u8[32768]{0}', space=vmem, size = 0x8000, scoped, tag = 'input window, operand 15, single buffered']
    #allocation31 [shape = 'u8[512]{0}', space=vmem, size = 0x400, scoped, tag = 'input window, operand 16, single buffered']
    #allocation32 [shape = 's32[1]{0}', space=sflag, size = 0x4, scoped, tag = 'scoped memory for tpu_custom_call.1']
    #allocation33 [shape = 'u8[32768]{0}', space=vmem, size = 0x8000, scoped, tag = 'output window, operand 0, single buffered']
    #allocation34 [shape = 'u8[4096]{0}', space=vmem, size = 0x1000, scoped, tag = 'output window, operand 1, single buffered']
    #allocation35 [shape = 's32[1]{0}', space=sflag, size = 0x4, scoped, tag = 'scoped memory for tpu_custom_call.1']
    %26 = vsyncpa [#allocation8], 0
    %27 = vsyncpa [#allocation11], 0
    %28 = vsyncpa [#allocation14], 0
    %29 = vsyncpa [#allocation17], 0
    %30 = vsyncpa [#allocation20], 0
    %31 = vsyncpa [#allocation23], 0
    %32 = vsyncpa [#allocation26], 0
    %33 = vsyncpa [#allocation29], 0
    %34 = vsyncpa [#allocation32], 0
    %35 = vsyncpa [#allocation9], 0
    %36 = vsyncpa [#allocation35], 0
    // Predicated region
    $region2: #{tpu_custom_call.1} parent=1 // pred_check
      _
    $region3: #{tpu_custom_call.1} parent=1 // pred_check_branch
      %38 = sbr.rel (0) target = $region5
    $region4: #{tpu_custom_call.1} parent=1 // pred_region
      %s40 = ssub.s32 128, 128
      %41 = vsyncadd [#allocation8], %s40
      %s43 = sshll.u32 [#allocation7], 4
      %s44 = int_to_ptr.vmem [resolvable:$true] %s43
      %46 = dma.hbm_to_vmem [thread:$0]  %s0, 128, %s44, [#allocation8]
    $region5: #{tpu_custom_call.1} parent=1 // pred_fallthru
      _
    // Predicated region
    $region6: #{tpu_custom_call.1} parent=1 // pred_check
      _
    $region7: #{tpu_custom_call.1} parent=1 // pred_check_branch
      %48 = sbr.rel (0) target = $region9
    $region8: #{tpu_custom_call.1} parent=1 // pred_region
      %s50 = ssub.s32 1024, 1024
      %51 = vsyncadd [#allocation11], %s50
      %s52 = sshll.u32 [#allocation10], 4
      %s53 = int_to_ptr.vmem [resolvable:$true] %s52
      %58 = dma.hbm_to_vmem [thread:$0]  %s1, 1024, %s53, [#allocation11], 128, 128, 8
    $region9: #{tpu_custom_call.1} parent=1 // pred_fallthru
      _
    // Predicated region
    $region10: #{tpu_custom_call.1} parent=1 // pred_check
      _
    $region11: #{tpu_custom_call.1} parent=1 // pred_check_branch
      %60 = sbr.rel (0) target = $region13
    $region12: #{tpu_custom_call.1} parent=1 // pred_region
      %s62 = ssub.s32 128, 128
      %63 = vsyncadd [#allocation11], %s62
      %s65 = sshll.u32 [#allocation12], 4
      %s66 = int_to_ptr.vmem [resolvable:$true] %s65
      %68 = dma.hbm_to_vmem [thread:$0]  %s2, 128, %s66, [#allocation11]
    $region13: #{tpu_custom_call.1} parent=1 // pred_fallthru
      _
    // Predicated region
    $region14: #{tpu_custom_call.1} parent=1 // pred_check
      _
    $region15: #{tpu_custom_call.1} parent=1 // pred_check_branch
      %70 = sbr.rel (0) target = $region17
    $region16: #{tpu_custom_call.1} parent=1 // pred_region
      %s72 = ssub.s32 1024, 1024
      %73 = vsyncadd [#allocation14], %s72
      %s74 = sshll.u32 [#allocation13], 4
      %s75 = int_to_ptr.vmem [resolvable:$true] %s74
      %80 = dma.hbm_to_vmem [thread:$0]  %s3, 1024, %s75, [#allocation14], 64, 64, 4
    $region17: #{tpu_custom_call.1} parent=1 // pred_fallthru
      _
    // Predicated region
    $region18: #{tpu_custom_call.1} parent=1 // pred_check
      _
    $region19: #{tpu_custom_call.1} parent=1 // pred_check_branch
      %82 = sbr.rel (0) target = $region21
    $region20: #{tpu_custom_call.1} parent=1 // pred_region
      %s84 = ssub.s32 1024, 1024
      %85 = vsyncadd [#allocation14], %s84
      %s86 = sshll.u32 [#allocation15], 4
      %s87 = int_to_ptr.vmem [resolvable:$true] %s86
      %92 = dma.hbm_to_vmem [thread:$0]  %s4, 1024, %s87, [#allocation14], 64, 64, 4
    $region21: #{tpu_custom_call.1} parent=1 // pred_fallthru
      _
    // Predicated region
    $region22: #{tpu_custom_call.1} parent=1 // pred_check
      _
    $region23: #{tpu_custom_call.1} parent=1 // pred_check_branch
      %94 = sbr.rel (0) target = $region25
    $region24: #{tpu_custom_call.1} parent=1 // pred_region
      %s96 = ssub.s32 16, 16
      %97 = vsyncadd [#allocation17], %s96
      %s99 = sshll.u32 [#allocation16], 4
      %s100 = int_to_ptr.vmem [resolvable:$true] %s99
      %102 = dma.hbm_to_vmem [thread:$0]  %s5, 16, %s100, [#allocation17]
    $region25: #{tpu_custom_call.1} parent=1 // pred_fallthru
      _
    // Predicated region
    $region26: #{tpu_custom_call.1} parent=1 // pred_check
      _
    $region27: #{tpu_custom_call.1} parent=1 // pred_check_branch
      %104 = sbr.rel (0) target = $region29
    $region28: #{tpu_custom_call.1} parent=1 // pred_region
      %s106 = ssub.s32 1024, 1024
      %107 = vsyncadd [#allocation17], %s106
      %s108 = sshll.u32 [#allocation18], 4
      %s109 = int_to_ptr.vmem [resolvable:$true] %s108
      %114 = dma.hbm_to_vmem [thread:$0]  %s6, 1024, %s109, [#allocation17], 64, 64, 4
    $region29: #{tpu_custom_call.1} parent=1 // pred_fallthru
      _
    // Predicated region
    $region30: #{tpu_custom_call.1} parent=1 // pred_check
      _
    $region31: #{tpu_custom_call.1} parent=1 // pred_check_branch
      %116 = sbr.rel (0) target = $region33
    $region32: #{tpu_custom_call.1} parent=1 // pred_region
      %s118 = ssub.s32 16, 16
      %119 = vsyncadd [#allocation20], %s118
      %s121 = sshll.u32 [#allocation19], 4
      %s122 = int_to_ptr.vmem [resolvable:$true] %s121
      %124 = dma.hbm_to_vmem [thread:$0]  %s7, 16, %s122, [#allocation20]
    $region33: #{tpu_custom_call.1} parent=1 // pred_fallthru
      _
    // Predicated region
    $region34: #{tpu_custom_call.1} parent=1 // pred_check
      _
    $region35: #{tpu_custom_call.1} parent=1 // pred_check_branch
      %126 = sbr.rel (0) target = $region37
    $region36: #{tpu_custom_call.1} parent=1 // pred_region
      %s128 = ssub.s32 16, 16
      %129 = vsyncadd [#allocation20], %s128
      %s131 = sshll.u32 [#allocation21], 4
      %s132 = int_to_ptr.vmem [resolvable:$true] %s131
      %134 = dma.hbm_to_vmem [thread:$0]  %s8, 16, %s132, [#allocation20]
    $region37: #{tpu_custom_call.1} parent=1 // pred_fallthru
      _
    // Predicated region
    $region38: #{tpu_custom_call.1} parent=1 // pred_check
      _
    $region39: #{tpu_custom_call.1} parent=1 // pred_check_branch
      %136 = sbr.rel (0) target = $region41
    $region40: #{tpu_custom_call.1} parent=1 // pred_region
      _
    $region41: #{tpu_custom_call.1} parent=1 // pred_fallthru
      _
    // Predicated region
    $region42: #{tpu_custom_call.1} parent=1 // pred_check
      _
    $region43: #{tpu_custom_call.1} parent=1 // pred_check_branch
      %138 = sbr.rel (0) target = $region45
    $region44: #{tpu_custom_call.1} parent=1 // pred_region
      %s140 = ssub.s32 3072, 3072
      %141 = vsyncadd [#allocation23], %s140
      %s142 = sshll.u32 [#allocation22], 4
      %s143 = int_to_ptr.vmem [resolvable:$true] %s142
      %148 = dma.hbm_to_vmem [thread:$0]  %s10, 3072, %s143, [#allocation23], 192, 192, 12
    $region45: #{tpu_custom_call.1} parent=1 // pred_fallthru
      _
    // Predicated region
    $region46: #{tpu_custom_call.1} parent=1 // pred_check
      _
    $region47: #{tpu_custom_call.1} parent=1 // pred_check_branch
      %150 = sbr.rel (0) target = $region49
    $region48: #{tpu_custom_call.1} parent=1 // pred_region
      %s152 = ssub.s32 3072, 3072
      %153 = vsyncadd [#allocation23], %s152
      %s154 = sshll.u32 [#allocation24], 4
      %s155 = int_to_ptr.vmem [resolvable:$true] %s154
      %160 = dma.hbm_to_vmem [thread:$0]  %s11, 3072, %s155, [#allocation23], 192, 192, 12
    $region49: #{tpu_custom_call.1} parent=1 // pred_fallthru
      _
    // Predicated region
    $region50: #{tpu_custom_call.1} parent=1 // pred_check
      _
    $region51: #{tpu_custom_call.1} parent=1 // pred_check_branch
      %162 = sbr.rel (0) target = $region53
    $region52: #{tpu_custom_call.1} parent=1 // pred_region
      %s164 = ssub.s32 3072, 3072
      %165 = vsyncadd [#allocation26], %s164
      %s166 = sshll.u32 [#allocation25], 4
      %s167 = int_to_ptr.vmem [resolvable:$true] %s166
      %172 = dma.hbm_to_vmem [thread:$0]  %s12, 3072, %s167, [#allocation26], 192, 192, 12
    $region53: #{tpu_custom_call.1} parent=1 // pred_fallthru
      _
    // Predicated region
    $region54: #{tpu_custom_call.1} parent=1 // pred_check
      _
    $region55: #{tpu_custom_call.1} parent=1 // pred_check_branch
      %174 = sbr.rel (0) target = $region57
    $region56: #{tpu_custom_call.1} parent=1 // pred_region
      %s176 = ssub.s32 48, 48
      %177 = vsyncadd [#allocation26], %s176
      %s179 = sshll.u32 [#allocation27], 4
      %s180 = int_to_ptr.vmem [resolvable:$true] %s179
      %182 = dma.hbm_to_vmem [thread:$0]  %s13, 48, %s180, [#allocation26]
    $region57: #{tpu_custom_call.1} parent=1 // pred_fallthru
      _
    // Predicated region
    $region58: #{tpu_custom_call.1} parent=1 // pred_check
      _
    $region59: #{tpu_custom_call.1} parent=1 // pred_check_branch
      %184 = sbr.rel (0) target = $region61
    $region60: #{tpu_custom_call.1} parent=1 // pred_region
      %s186 = ssub.s32 48, 48
      %187 = vsyncadd [#allocation29], %s186
      %s189 = sshll.u32 [#allocation28], 4
      %s190 = int_to_ptr.vmem [resolvable:$true] %s189
      %192 = dma.hbm_to_vmem [thread:$0]  %s14, 48, %s190, [#allocation29]
    $region61: #{tpu_custom_call.1} parent=1 // pred_fallthru
      _
    // Predicated region
    $region62: #{tpu_custom_call.1} parent=1 // pred_check
      _
    $region63: #{tpu_custom_call.1} parent=1 // pred_check_branch
      %194 = sbr.rel (0) target = $region65
    $region64: #{tpu_custom_call.1} parent=1 // pred_region
      %s196 = ssub.s32 1024, 1024
      %197 = vsyncadd [#allocation29], %s196
      %s198 = sshll.u32 [#allocation30], 4
      %s199 = int_to_ptr.vmem [resolvable:$true] %s198
      %204 = dma.hbm_to_vmem [thread:$0]  %s15, 1024, %s199, [#allocation29], 64, 64, 4
    $region65: #{tpu_custom_call.1} parent=1 // pred_fallthru
      _
    // Predicated region
    $region66: #{tpu_custom_call.1} parent=1 // pred_check
      _
    $region67: #{tpu_custom_call.1} parent=1 // pred_check_branch
      %206 = sbr.rel (0) target = $region69
    $region68: #{tpu_custom_call.1} parent=1 // pred_region
      %s208 = ssub.s32 16, 16
      %209 = vsyncadd [#allocation32], %s208
      %s211 = sshll.u32 [#allocation31], 4
      %s212 = int_to_ptr.vmem [resolvable:$true] %s211
      %214 = dma.hbm_to_vmem [thread:$0]  %s16, 16, %s212, [#allocation32]
    $region69: #{tpu_custom_call.1} parent=1 // pred_fallthru
      _
    // Predicated region
    $region70: #{tpu_custom_call.1} parent=1 // pred_check
      _
    $region71: #{tpu_custom_call.1} parent=1 // pred_check_branch
      %216 = sbr.rel (0) target = $region73
    $region72: #{tpu_custom_call.1} parent=1 // pred_region
      %217 = dma.done [#allocation8], 128
    $region73: #{tpu_custom_call.1} parent=1 // pred_fallthru
      _
    // Predicated region
    $region74: #{tpu_custom_call.1} parent=1 // pred_check
      _
    $region75: #{tpu_custom_call.1} parent=1 // pred_check_branch
      %219 = sbr.rel (0) target = $region77
    $region76: #{tpu_custom_call.1} parent=1 // pred_region
      %220 = dma.done [#allocation11], 1024
    $region77: #{tpu_custom_call.1} parent=1 // pred_fallthru
      _
    // Predicated region
    $region78: #{tpu_custom_call.1} parent=1 // pred_check
      _
    $region79: #{tpu_custom_call.1} parent=1 // pred_check_branch
      %222 = sbr.rel (0) target = $region81
    $region80: #{tpu_custom_call.1} parent=1 // pred_region
      %223 = dma.done [#allocation11], 128
    $region81: #{tpu_custom_call.1} parent=1 // pred_fallthru
      _
    // Predicated region
    $region82: #{tpu_custom_call.1} parent=1 // pred_check
      _
    $region83: #{tpu_custom_call.1} parent=1 // pred_check_branch
      %225 = sbr.rel (0) target = $region85
    $region84: #{tpu_custom_call.1} parent=1 // pred_region
      %226 = dma.done [#allocation14], 1024
    $region85: #{tpu_custom_call.1} parent=1 // pred_fallthru
      _
    // Predicated region
    $region86: #{tpu_custom_call.1} parent=1 // pred_check
      _
    $region87: #{tpu_custom_call.1} parent=1 // pred_check_branch
      %228 = sbr.rel (0) target = $region89
    $region88: #{tpu_custom_call.1} parent=1 // pred_region
      %229 = dma.done [#allocation14], 1024
    $region89: #{tpu_custom_call.1} parent=1 // pred_fallthru
      _
    // Predicated region
    $region90: #{tpu_custom_call.1} parent=1 // pred_check
      _
    $region91: #{tpu_custom_call.1} parent=1 // pred_check_branch
      %231 = sbr.rel (0) target = $region93
    $region92: #{tpu_custom_call.1} parent=1 // pred_region
      %232 = dma.done [#allocation17], 16
    $region93: #{tpu_custom_call.1} parent=1 // pred_fallthru
      _
    // Predicated region
    $region94: #{tpu_custom_call.1} parent=1 // pred_check
      _
    $region95: #{tpu_custom_call.1} parent=1 // pred_check_branch
      %234 = sbr.rel (0) target = $region97
    $region96: #{tpu_custom_call.1} parent=1 // pred_region
      %235 = dma.done [#allocation17], 1024
    $region97: #{tpu_custom_call.1} parent=1 // pred_fallthru
      _
    // Predicated region
    $region98: #{tpu_custom_call.1} parent=1 // pred_check
      _
    $region99: #{tpu_custom_call.1} parent=1 // pred_check_branch
      %237 = sbr.rel (0) target = $region101
    $region100: #{tpu_custom_call.1} parent=1 // pred_region
      %238 = dma.done [#allocation20], 16
    $region101: #{tpu_custom_call.1} parent=1 // pred_fallthru
      _
    // Predicated region
    $region102: #{tpu_custom_call.1} parent=1 // pred_check
      _
    $region103: #{tpu_custom_call.1} parent=1 // pred_check_branch
      %240 = sbr.rel (0) target = $region105
    $region104: #{tpu_custom_call.1} parent=1 // pred_region
      %241 = dma.done [#allocation20], 16
    $region105: #{tpu_custom_call.1} parent=1 // pred_fallthru
      _
    // Predicated region
    $region106: #{tpu_custom_call.1} parent=1 // pred_check
      _
    $region107: #{tpu_custom_call.1} parent=1 // pred_check_branch
      %243 = sbr.rel (0) target = $region109
    $region108: #{tpu_custom_call.1} parent=1 // pred_region
      %244 = dma.done [#allocation23], 3072
    $region109: #{tpu_custom_call.1} parent=1 // pred_fallthru
      _
    // Predicated region
    $region110: #{tpu_custom_call.1} parent=1 // pred_check
      _
    $region111: #{tpu_custom_call.1} parent=1 // pred_check_branch
      %246 = sbr.rel (0) target = $region113
    $region112: #{tpu_custom_call.1} parent=1 // pred_region
      %247 = dma.done [#allocation23], 3072
    $region113: #{tpu_custom_call.1} parent=1 // pred_fallthru
      _
    // Predicated region
    $region114: #{tpu_custom_call.1} parent=1 // pred_check
      _
    $region115: #{tpu_custom_call.1} parent=1 // pred_check_branch
      %249 = sbr.rel (0) target = $region117
    $region116: #{tpu_custom_call.1} parent=1 // pred_region
      %250 = dma.done [#allocation26], 3072
    $region117: #{tpu_custom_call.1} parent=1 // pred_fallthru
      _
    // Predicated region
    $region118: #{tpu_custom_call.1} parent=1 // pred_check
      _
    $region119: #{tpu_custom_call.1} parent=1 // pred_check_branch
      %252 = sbr.rel (0) target = $region121
    $region120: #{tpu_custom_call.1} parent=1 // pred_region
      %253 = dma.done [#allocation26], 48
    $region121: #{tpu_custom_call.1} parent=1 // pred_fallthru
      _
    // Predicated region
    $region122: #{tpu_custom_call.1} parent=1 // pred_check
      _
    $region123: #{tpu_custom_call.1} parent=1 // pred_check_branch
      %255 = sbr.rel (0) target = $region125
    $region124: #{tpu_custom_call.1} parent=1 // pred_region
      %256 = dma.done [#allocation29], 48
    $region125: #{tpu_custom_call.1} parent=1 // pred_fallthru
      _
    // Predicated region
    $region126: #{tpu_custom_call.1} parent=1 // pred_check
      _
    $region127: #{tpu_custom_call.1} parent=1 // pred_check_branch
      %258 = sbr.rel (0) target = $region129
    $region128: #{tpu_custom_call.1} parent=1 // pred_region
      %259 = dma.done [#allocation29], 1024
    $region129: #{tpu_custom_call.1} parent=1 // pred_fallthru
      _
    // Predicated region
    $region130: #{tpu_custom_call.1} parent=1 // pred_check
      _
    $region131: #{tpu_custom_call.1} parent=1 // pred_check_branch
      %261 = sbr.rel (0) target = $region133
    $region132: #{tpu_custom_call.1} parent=1 // pred_region
      %262 = dma.done [#allocation32], 16
    $region133: #{tpu_custom_call.1} parent=1 // pred_fallthru
      _
    %v264 = vld [vmem:[#allocation7] sm:$0xff]
    %265 = vst [vmem:[#allocation2] sm:$0xff] %v264
    %v266 = vld [vmem:[#allocation13] sm:$0x1]
    %v267 = vunpack.c.l.bf16 %v266
    %v268 = vlaneseq
    %v269 = vshrl.u32 %v268, 7
    %v270 = vsub.s32 0, %v269
    %v271 = vrot.slane %v267, %v270
    %272 = vst [vmem:[#allocation3] sm:$0xff] %v271
    %v273 = vld [vmem:[#allocation10] sm:$0xff]
    %v274 = vld [vmem:[#allocation10 + $0x8] sm:$0xff]
    %v275 = vld [vmem:[#allocation10 + $0x10] sm:$0xff]
    %v276 = vld [vmem:[#allocation10 + $0x18] sm:$0xff]
    %v277 = vld [vmem:[#allocation10 + $0x20] sm:$0xff]
    %v278 = vld [vmem:[#allocation10 + $0x28] sm:$0xff]
    %v279 = vld [vmem:[#allocation10 + $0x30] sm:$0xff]
    %v280 = vld [vmem:[#allocation10 + $0x38] sm:$0xff]
    %v281 = vpack.c.bf16 %v274, %v273
    %v282 = vpack.c.bf16 %v276, %v275
    %v283 = vpack.c.bf16 %v278, %v277
    %v284 = vpack.c.bf16 %v280, %v279
    %v285 = vld [vmem:[#allocation18] sm:$0xf]
    %v286 = vld [vmem:[#allocation18 + $0x4] sm:$0xf]
    %v287 = vld [vmem:[#allocation18 + $0x8] sm:$0xf]
    %v288 = vld [vmem:[#allocation18 + $0xc] sm:$0xf]
    %v289 = vld [vmem:[#allocation18 + $0x10] sm:$0xf]
    %v290 = vld [vmem:[#allocation18 + $0x14] sm:$0xf]
    %v291 = vld [vmem:[#allocation18 + $0x18] sm:$0xf]
    %v292 = vld [vmem:[#allocation18 + $0x1c] sm:$0xf]
    %v293 = vld [vmem:[#allocation18 + $0x20] sm:$0xf]
    %v294 = vld [vmem:[#allocation18 + $0x24] sm:$0xf]
    %v295 = vld [vmem:[#allocation18 + $0x28] sm:$0xf]
    %v296 = vld [vmem:[#allocation18 + $0x2c] sm:$0xf]
    %v297 = vld [vmem:[#allocation18 + $0x30] sm:$0xf]
    %v298 = vld [vmem:[#allocation18 + $0x34] sm:$0xf]
    %v299 = vld [vmem:[#allocation18 + $0x38] sm:$0xf]
    %v300 = vld [vmem:[#allocation18 + $0x3c] sm:$0xf]
    %v317 = vunpack.c.l.b16 %v285
    %v318 = vunpack.c.l.b16 %v286
    %v319 = vunpack.c.l.b16 %v287
    %v320 = vunpack.c.l.b16 %v288
    %v321 = vunpack.c.l.b16 %v289
    %v322 = vunpack.c.l.b16 %v290
    %v323 = vunpack.c.l.b16 %v291
    %v324 = vunpack.c.l.b16 %v292
    %v325 = vunpack.c.l.b16 %v293
    %v326 = vunpack.c.l.b16 %v294
    %v327 = vunpack.c.l.b16 %v295
    %v328 = vunpack.c.l.b16 %v296
    %v329 = vunpack.c.l.b16 %v297
    %v330 = vunpack.c.l.b16 %v298
    %v331 = vunpack.c.l.b16 %v299
    %v332 = vunpack.c.l.b16 %v300
    %v333 = vpack.c.b16 %v318, %v317
    %v334 = vpack.c.b16 %v320, %v319
    %v335 = vpack.c.b16 %v322, %v321
    %v336 = vpack.c.b16 %v324, %v323
    %v337 = vpack.c.b16 %v326, %v325
    %v338 = vpack.c.b16 %v328, %v327
    %v339 = vpack.c.b16 %v330, %v329
    %v340 = vpack.c.b16 %v332, %v331
    %349 = vmatprep.subr.bf16.mxu0 0
    %350 = vmatpush1.bf16.msra.mxu0 %v333
    %351 = vmatprep.subr.bf16.mxu0 0
    %352 = vmatpush1.bf16.msra.mxu0 %v334
    %353 = vmatprep.subr.bf16.mxu0 0
    %354 = vmatpush1.bf16.msra.mxu0 %v335
    %355 = vmatprep.subr.bf16.mxu0 0
    %356 = vmatpush1.bf16.msra.mxu0 %v336
    %357 = vmatprep.subr.bf16.mxu0 0
    %358 = vmatpush1.bf16.msra.mxu0 %v337
    %359 = vmatprep.subr.bf16.mxu0 0
    %360 = vmatpush1.bf16.msra.mxu0 %v338
    %361 = vmatprep.subr.bf16.mxu0 0
    %362 = vmatpush1.bf16.msra.mxu0 %v339
    %363 = vmatprep.subr.bf16.mxu0 0
    %364 = vmatpush1.bf16.msra.mxu0 %v340
    %365 = vmatprep.subr.bf16.mxu0 0
    %366 = vmatpush1.bf16.msra.mxu0 0
    %367 = vmatprep.subr.bf16.mxu0 0
    %368 = vmatpush1.bf16.msra.mxu0 0
    %369 = vmatprep.subr.bf16.mxu0 0
    %370 = vmatpush1.bf16.msra.mxu0 0
    %371 = vmatprep.subr.bf16.mxu0 0
    %372 = vmatpush1.bf16.msra.mxu0 0
    %373 = vmatprep.subr.bf16.mxu0 0
    %374 = vmatpush1.bf16.msra.mxu0 0
    %375 = vmatprep.subr.bf16.mxu0 0
    %376 = vmatpush1.bf16.msra.mxu0 0
    %377 = vmatprep.subr.bf16.mxu0 0
    %378 = vmatpush1.bf16.msra.mxu0 0
    %379 = vmatprep.subr.bf16.mxu0 0
    %380 = vmatpush1.bf16.msra.mxu0 0
    %381 = vmatprep.mubr.bf16.mxu0 0
    %382 = vmatmul.mubr.bf16.gmra.mrb[0].mxu0 %v281
    %v383 = vpop.f32.mrb[0].mxu0
    %v384 = vadd.f32 0.0, %v383
    %v385 = vpop.f32.mrb[0].mxu0
    %v386 = vpop.f32.mrb[0].mxu0
    %v387 = vadd.f32 0.0, %v386
    %v388 = vpop.f32.mrb[0].mxu0
    %389 = vmatprep.mubr.bf16.mxu0 0
    %390 = vmatmul.mubr.bf16.gmra.mrb[0].mxu0 %v282
    %v391 = vpop.f32.mrb[0].mxu0
    %v392 = vadd.f32 0.0, %v391
    %v393 = vpop.f32.mrb[0].mxu0
    %v394 = vpop.f32.mrb[0].mxu0
    %v395 = vadd.f32 0.0, %v394
    %v396 = vpop.f32.mrb[0].mxu0
    %397 = vmatprep.mubr.bf16.mxu0 0
    %398 = vmatmul.mubr.bf16.gmra.mrb[0].mxu0 %v283
    %v399 = vpop.f32.mrb[0].mxu0
    %v400 = vadd.f32 0.0, %v399
    %v401 = vpop.f32.mrb[0].mxu0
    %v402 = vpop.f32.mrb[0].mxu0
    %v403 = vadd.f32 0.0, %v402
    %v404 = vpop.f32.mrb[0].mxu0
    %405 = vmatprep.mubr.bf16.mxu0 0
    %406 = vmatmul.mubr.bf16.gmra.mrb[0].mxu0 %v284
    %v407 = vpop.f32.mrb[0].mxu0
    %v408 = vadd.f32 0.0, %v407
    %v409 = vpop.f32.mrb[0].mxu0
    %v410 = vpop.f32.mrb[0].mxu0
    %v411 = vadd.f32 0.0, %v410
    %v412 = vpop.f32.mrb[0].mxu0
    %413 = vdwg.mxu0
    %v414 = vld [vmem:[#allocation19] sm:$0x1]
    %v416 = vlaneseq
    %v417 = vshrl.u32 %v416, 7
    %v418 = vsub.s32 0, %v417
    %v419 = vrot.slane %v414, %v418
    %v421 = vadd.f32 %v384, %v419
    %v422 = vadd.f32 %v387, %v419
    %v423 = vadd.f32 %v392, %v419
    %v424 = vadd.f32 %v395, %v419
    %v425 = vadd.f32 %v400, %v419
    %v426 = vadd.f32 %v403, %v419
    %v427 = vadd.f32 %v408, %v419
    %v428 = vadd.f32 %v411, %v419
    %429 = vst [vmem:[#allocation4] sm:$0xff] %v421
    %430 = vst [vmem:[#allocation4 + $0x8] sm:$0xff] %v422
    %431 = vst [vmem:[#allocation4 + $0x10] sm:$0xff] %v423
    %432 = vst [vmem:[#allocation4 + $0x18] sm:$0xff] %v424
    %433 = vst [vmem:[#allocation4 + $0x20] sm:$0xff] %v425
    %434 = vst [vmem:[#allocation4 + $0x28] sm:$0xff] %v426
    %435 = vst [vmem:[#allocation4 + $0x30] sm:$0xff] %v427
    %436 = vst [vmem:[#allocation4 + $0x38] sm:$0xff] %v428
    loop: start=0, step=1, limit=8
    $region134: #{tpu_custom_call.1} parent=1 // loop_pre_header
      _
    $region135: #{tpu_custom_call.1} parent=1 // loop_header
      %s438 = sphi 0, %s442
      %p439 = scmp.ge.s32.totalorder %s438, 8
    $region136: #{tpu_custom_call.1} parent=1 // loop_header_branch
      %441 = sbr.rel (%p439) target = $region140
    $region137: #{tpu_custom_call.1} parent=1 // loop_body
      %v443 = vld [vmem:[#allocation2] sm:$0xff]
      %v444 = vld [vmem:[#allocation3] sm:$0xff]
      %v445 = vpack.c.bf16 %v443, %v443
      %v446 = vld [vmem:[#allocation15] sm:$0xf]
      %v447 = vld [vmem:[#allocation15 + $0x4] sm:$0xf]
      %v448 = vld [vmem:[#allocation15 + $0x8] sm:$0xf]
      %v449 = vld [vmem:[#allocation15 + $0xc] sm:$0xf]
      %v450 = vld [vmem:[#allocation15 + $0x10] sm:$0xf]
      %v451 = vld [vmem:[#allocation15 + $0x14] sm:$0xf]
      %v452 = vld [vmem:[#allocation15 + $0x18] sm:$0xf]
      %v453 = vld [vmem:[#allocation15 + $0x1c] sm:$0xf]
      %v454 = vld [vmem:[#allocation15 + $0x20] sm:$0xf]
      %v455 = vld [vmem:[#allocation15 + $0x24] sm:$0xf]
      %v456 = vld [vmem:[#allocation15 + $0x28] sm:$0xf]
      %v457 = vld [vmem:[#allocation15 + $0x2c] sm:$0xf]
      %v458 = vld [vmem:[#allocation15 + $0x30] sm:$0xf]
      %v459 = vld [vmem:[#allocation15 + $0x34] sm:$0xf]
      %v460 = vld [vmem:[#allocation15 + $0x38] sm:$0xf]
      %v461 = vld [vmem:[#allocation15 + $0x3c] sm:$0xf]
      %v462 = vld [vmem:[#allocation16] sm:$0x1]
      %v464 = vlaneseq
      %v465 = vshrl.u32 %v464, 7
      %v466 = vsub.s32 0, %v465
      %v467 = vrot.slane %v462, %v466
      %v485 = vunpack.c.l.b16 %v446
      %v486 = vunpack.c.l.b16 %v447
      %v487 = vunpack.c.l.b16 %v448
      %v488 = vunpack.c.l.b16 %v449
      %v489 = vunpack.c.l.b16 %v450
      %v490 = vunpack.c.l.b16 %v451
      %v491 = vunpack.c.l.b16 %v452
      %v492 = vunpack.c.l.b16 %v453
      %v493 = vunpack.c.l.b16 %v454
      %v494 = vunpack.c.l.b16 %v455
      %v495 = vunpack.c.l.b16 %v456
      %v496 = vunpack.c.l.b16 %v457
      %v497 = vunpack.c.l.b16 %v458
      %v498 = vunpack.c.l.b16 %v459
      %v499 = vunpack.c.l.b16 %v460
      %v500 = vunpack.c.l.b16 %v461
      %v501 = vpack.c.b16 %v486, %v485
      %v502 = vpack.c.b16 %v488, %v487
      %v503 = vpack.c.b16 %v490, %v489
      %v504 = vpack.c.b16 %v492, %v491
      %v505 = vpack.c.b16 %v494, %v493
      %v506 = vpack.c.b16 %v496, %v495
      %v507 = vpack.c.b16 %v498, %v497
      %v508 = vpack.c.b16 %v500, %v499
      %517 = vmatprep.subr.bf16.mxu0 0
      %518 = vmatpush1.bf16.msra.mxu0 %v501
      %519 = vmatprep.subr.bf16.mxu0 0
      %520 = vmatpush1.bf16.msra.mxu0 %v502
      %521 = vmatprep.subr.bf16.mxu0 0
      %522 = vmatpush1.bf16.msra.mxu0 %v503
      %523 = vmatprep.subr.bf16.mxu0 0
      %524 = vmatpush1.bf16.msra.mxu0 %v504
      %525 = vmatprep.subr.bf16.mxu0 0
      %526 = vmatpush1.bf16.msra.mxu0 %v505
      %527 = vmatprep.subr.bf16.mxu0 0
      %528 = vmatpush1.bf16.msra.mxu0 %v506
      %529 = vmatprep.subr.bf16.mxu0 0
      %530 = vmatpush1.bf16.msra.mxu0 %v507
      %531 = vmatprep.subr.bf16.mxu0 0
      %532 = vmatpush1.bf16.msra.mxu0 %v508
      %533 = vmatprep.subr.bf16.mxu0 0
      %534 = vmatpush1.bf16.msra.mxu0 0
      %535 = vmatprep.subr.bf16.mxu0 0
      %536 = vmatpush1.bf16.msra.mxu0 0
      %537 = vmatprep.subr.bf16.mxu0 0
      %538 = vmatpush1.bf16.msra.mxu0 0
      %539 = vmatprep.subr.bf16.mxu0 0
      %540 = vmatpush1.bf16.msra.mxu0 0
      %541 = vmatprep.subr.bf16.mxu0 0
      %542 = vmatpush1.bf16.msra.mxu0 0
      %543 = vmatprep.subr.bf16.mxu0 0
      %544 = vmatpush1.bf16.msra.mxu0 0
      %545 = vmatprep.subr.bf16.mxu0 0
      %546 = vmatpush1.bf16.msra.mxu0 0
      %547 = vmatprep.subr.bf16.mxu0 0
      %548 = vmatpush1.bf16.msra.mxu0 0
      %549 = vmatprep.mubr.bf16.mxu0 0
      %550 = vmatmul.mubr.bf16.gmra.mrb[0].mxu0 %v445
      %v551 = vpop.f32.mrb[0].mxu0
      %v552 = vadd.f32 %v467, %v551
      %v553 = vpop.f32.mrb[0].mxu0
      %v554 = vpop.f32.mrb[0].mxu0
      %v555 = vpop.f32.mrb[0].mxu0
      %556 = vdwg.mxu0
      %v558 = vcombine.high %v552, %v552
      %v560 = vunpack.c.l.s4 1966171168
      %v561 = vunpack.c.0.s8 %v560
      %v562 = vlaneseq
      %v563 = vshrl.u32 %v562, 7
      %v564 = vsub.s32 %v561, %v563
      %v565 = vrot.slane %v552, %v564
      %v567 = vunpack.c.l.s4 1966171168
      %v568 = vunpack.c.0.s8 %v567
      %v569 = vlaneseq
      %v570 = vshrl.u32 %v569, 7
      %v571 = vsub.s32 %v568, %v570
      %v572 = vrot.slane %v558, %v571
      %v573 = vcombine.high %v565, %v565
      %v574 = vcombine.high %v572, %v572
      %v576 = vunpack.c.l.s4 1966171168
      %v577 = vunpack.c.0.s8 %v576
      %v578 = vlaneseq
      %v579 = vshrl.u32 %v578, 7
      %v580 = vsub.s32 %v577, %v579
      %v581 = vrot.slane %v565, %v580
      %v583 = vunpack.c.l.s4 1966171168
      %v584 = vunpack.c.0.s8 %v583
      %v585 = vlaneseq
      %v586 = vshrl.u32 %v585, 7
      %v587 = vsub.s32 %v584, %v586
      %v588 = vrot.slane %v572, %v587
      %v590 = vunpack.c.l.s4 1966171168
      %v591 = vunpack.c.0.s8 %v590
      %v592 = vlaneseq
      %v593 = vshrl.u32 %v592, 7
      %v594 = vsub.s32 %v591, %v593
      %v595 = vrot.slane %v573, %v594
      %v597 = vunpack.c.l.s4 1966171168
      %v598 = vunpack.c.0.s8 %v597
      %v599 = vlaneseq
      %v600 = vshrl.u32 %v599, 7
      %v601 = vsub.s32 %v598, %v600
      %v602 = vrot.slane %v574, %v601
      %v603 = vcombine.high %v581, %v581
      %v604 = vcombine.high %v588, %v588
      %v605 = vcombine.high %v595, %v595
      %v606 = vcombine.high %v602, %v602
      %v607 = vld [vmem:[#allocation4] sm:$0xff]
      %v608 = vld [vmem:[#allocation4 + $0x8] sm:$0xff]
      %v609 = vld [vmem:[#allocation4 + $0x10] sm:$0xff]
      %v610 = vld [vmem:[#allocation4 + $0x18] sm:$0xff]
      %v611 = vld [vmem:[#allocation4 + $0x20] sm:$0xff]
      %v612 = vld [vmem:[#allocation4 + $0x28] sm:$0xff]
      %v613 = vld [vmem:[#allocation4 + $0x30] sm:$0xff]
      %v614 = vld [vmem:[#allocation4 + $0x38] sm:$0xff]
      %v615 = vlaneseq
      %v616 = vshrl.u32 %v615, 7
      %v617 = vsub.s32 0, %v616
      %v618 = vrot.slane %v581, %v617
      %v619 = vlaneseq
      %v620 = vshrl.u32 %v619, 7
      %v621 = vsub.s32 0, %v620
      %v622 = vrot.slane %v595, %v621
      %v623 = vlaneseq
      %v624 = vshrl.u32 %v623, 7
      %v625 = vsub.s32 0, %v624
      %v626 = vrot.slane %v603, %v625
      %v627 = vlaneseq
      %v628 = vshrl.u32 %v627, 7
      %v629 = vsub.s32 0, %v628
      %v630 = vrot.slane %v605, %v629
      %v631 = vlaneseq
      %v632 = vshrl.u32 %v631, 7
      %v633 = vsub.s32 0, %v632
      %v634 = vrot.slane %v588, %v633
      %v635 = vlaneseq
      %v636 = vshrl.u32 %v635, 7
      %v637 = vsub.s32 0, %v636
      %v638 = vrot.slane %v602, %v637
      %v639 = vlaneseq
      %v640 = vshrl.u32 %v639, 7
      %v641 = vsub.s32 0, %v640
      %v642 = vrot.slane %v604, %v641
      %v643 = vlaneseq
      %v644 = vshrl.u32 %v643, 7
      %v645 = vsub.s32 0, %v644
      %v646 = vrot.slane %v606, %v645
      %v655 = vadd.f32 %v618, %v607
      %v656 = vadd.f32 %v622, %v608
      %v657 = vadd.f32 %v626, %v609
      %v658 = vadd.f32 %v630, %v610
      %v659 = vadd.f32 %v634, %v611
      %v660 = vadd.f32 %v638, %v612
      %v661 = vadd.f32 %v642, %v613
      %v662 = vadd.f32 %v646, %v614
      %v663 = vtanh.pop %v655
      %v664 = vtanh.pop %v656
      %v665 = vtanh.pop %v657
      %v666 = vtanh.pop %v658
      %v667 = vtanh.pop %v659
      %v668 = vtanh.pop %v660
      %v669 = vtanh.pop %v661
      %v670 = vtanh.pop %v662
      %v671 = vld [vmem:[#allocation21] sm:$0x1]
      %v673 = vlaneseq
      %v674 = vshrl.u32 %v673, 7
      %v675 = vsub.s32 0, %v674
      %v676 = vrot.slane %v671, %v675
      %v678 = vmul.f32 %v663, %v676
      %v679 = vmul.f32 %v664, %v676
      %v680 = vmul.f32 %v665, %v676
      %v681 = vmul.f32 %v666, %v676
      %v682 = vmul.f32 %v667, %v676
      %v683 = vmul.f32 %v668, %v676
      %v684 = vmul.f32 %v669, %v676
      %v685 = vmul.f32 %v670, %v676
      %686 = vadd.xlane.f32.xlu0 %v678
      %v687 = vpop.xlane.xlu0 %686
      %688 = vadd.xlane.f32.xlu0 %v679
      %v689 = vpop.xlane.xlu0 %688
      %690 = vadd.xlane.f32.xlu0 %v680
      %v691 = vpop.xlane.xlu0 %690
      %692 = vadd.xlane.f32.xlu0 %v681
      %v693 = vpop.xlane.xlu0 %692
      %694 = vadd.xlane.f32.xlu0 %v682
      %v695 = vpop.xlane.xlu0 %694
      %696 = vadd.xlane.f32.xlu0 %v683
      %v697 = vpop.xlane.xlu0 %696
      %698 = vadd.xlane.f32.xlu0 %v684
      %v699 = vpop.xlane.xlu0 %698
      %700 = vadd.xlane.f32.xlu0 %v685
      %v701 = vpop.xlane.xlu0 %700
      %v702 = vld [vmem:[#allocation6] sm:$0x1]
      %v704 = vlaneseq
      %v705 = vshrl.u32 %v704, 7
      %v706 = vsub.s32 0, %v705
      %v707 = vrot.slane %v702, %v706
      %708 = vset.pattern.permute.xlu0 0
      %709 = vperm.xlu0 %708, %v707
      %v710 = vpop.permute.xlu0 %709
      %v712 = vadd.f32 %v687, %v710
      %v713 = vadd.f32 %v689, %v710
      %v714 = vadd.f32 %v691, %v710
      %v715 = vadd.f32 %v693, %v710
      %v716 = vadd.f32 %v695, %v710
      %v717 = vadd.f32 %v697, %v710
      %v718 = vadd.f32 %v699, %v710
      %v719 = vadd.f32 %v701, %v710
      %v720 = vld [vmem:[#allocation12] sm:$0xff]
      %v722 = vlaneseq
      %v723 = vshrl.u32 %v722, 7
      %v724 = vsub.s32 0, %v723
      %v725 = vrot.slane %v720, %v724
      %727 = vbcast.lane.b32.xlu0 %v725, 256
      %v728 = vpop.permute.xlu0 %727
      %v729 = vlaneseq
      %v730 = vshrl.u32 %v729, 7
      %v731 = vsub.s32 1, %v730
      %v732 = vrot.slane %v720, %v731
      %734 = vbcast.lane.b32.xlu0 %v732, 256
      %v735 = vpop.permute.xlu0 %734
      %v736 = vlaneseq
      %v737 = vshrl.u32 %v736, 7
      %v738 = vsub.s32 2, %v737
      %v739 = vrot.slane %v720, %v738
      %741 = vbcast.lane.b32.xlu0 %v739, 256
      %v742 = vpop.permute.xlu0 %741
      %v743 = vlaneseq
      %v744 = vshrl.u32 %v743, 7
      %v745 = vsub.s32 3, %v744
      %v746 = vrot.slane %v720, %v745
      %748 = vbcast.lane.b32.xlu0 %v746, 256
      %v749 = vpop.permute.xlu0 %748
      %v750 = vlaneseq
      %v751 = vshrl.u32 %v750, 7
      %v752 = vsub.s32 4, %v751
      %v753 = vrot.slane %v720, %v752
      %755 = vbcast.lane.b32.xlu0 %v753, 256
      %v756 = vpop.permute.xlu0 %755
      %v757 = vlaneseq
      %v758 = vshrl.u32 %v757, 7
      %v759 = vsub.s32 5, %v758
      %v760 = vrot.slane %v720, %v759
      %762 = vbcast.lane.b32.xlu0 %v760, 256
      %v763 = vpop.permute.xlu0 %762
      %v764 = vlaneseq
      %v765 = vshrl.u32 %v764, 7
      %v766 = vsub.s32 6, %v765
      %v767 = vrot.slane %v720, %v766
      %769 = vbcast.lane.b32.xlu0 %v767, 256
      %v770 = vpop.permute.xlu0 %769
      %v771 = vlaneseq
      %v772 = vshrl.u32 %v771, 7
      %v773 = vsub.s32 7, %v772
      %v774 = vrot.slane %v720, %v773
      %776 = vbcast.lane.b32.xlu0 %v774, 256
      %v777 = vpop.permute.xlu0 %776
      %v786 = vadd.f32 %v712, %v728
      %v787 = vadd.f32 %v713, %v735
      %v788 = vadd.f32 %v714, %v742
      %v789 = vadd.f32 %v715, %v749
      %v790 = vadd.f32 %v716, %v756
      %v791 = vadd.f32 %v717, %v763
      %v792 = vadd.f32 %v718, %v770
      %v793 = vadd.f32 %v719, %v777
      %802 = vset.pattern.permute.xlu0 0
      %803 = vperm.xlu0 %802, %v786
      %v804 = vpop.permute.xlu0 %803
      %805 = vset.pattern.permute.xlu0 0
      %806 = vperm.xlu0 %805, %v787
      %v807 = vpop.permute.xlu0 %806
      %808 = vset.pattern.permute.xlu0 0
      %809 = vperm.xlu0 %808, %v788
      %v810 = vpop.permute.xlu0 %809
      %811 = vset.pattern.permute.xlu0 0
      %812 = vperm.xlu0 %811, %v789
      %v813 = vpop.permute.xlu0 %812
      %814 = vset.pattern.permute.xlu0 0
      %815 = vperm.xlu0 %814, %v790
      %v816 = vpop.permute.xlu0 %815
      %817 = vset.pattern.permute.xlu0 0
      %818 = vperm.xlu0 %817, %v791
      %v819 = vpop.permute.xlu0 %818
      %820 = vset.pattern.permute.xlu0 0
      %821 = vperm.xlu0 %820, %v792
      %v822 = vpop.permute.xlu0 %821
      %823 = vset.pattern.permute.xlu0 0
      %824 = vperm.xlu0 %823, %v793
      %v825 = vpop.permute.xlu0 %824
      %v826 = vlaneseq
      %v827 = vand.u32 %v826, 127
      %v828 = vlaneseq
      %v829 = vshrl.u32 %v828, 7
      %v830 = vsub.s32 %v827, %v829
      %v831 = vrot.slane %v804, %v830
      %v832 = vlaneseq
      %v833 = vshrl.u32 %v832, 7
      %v834 = vsub.s32 %v827, %v833
      %v835 = vrot.slane %v807, %v834
      %v836 = vlaneseq
      %v837 = vshrl.u32 %v836, 7
      %v838 = vsub.s32 %v827, %v837
      %v839 = vrot.slane %v810, %v838
      %v840 = vlaneseq
      %v841 = vshrl.u32 %v840, 7
      %v842 = vsub.s32 %v827, %v841
      %v843 = vrot.slane %v813, %v842
      %v844 = vlaneseq
      %v845 = vshrl.u32 %v844, 7
      %v846 = vsub.s32 %v827, %v845
      %v847 = vrot.slane %v816, %v846
      %v848 = vlaneseq
      %v849 = vshrl.u32 %v848, 7
      %v850 = vsub.s32 %v827, %v849
      %v851 = vrot.slane %v819, %v850
      %v852 = vlaneseq
      %v853 = vshrl.u32 %v852, 7
      %v854 = vsub.s32 %v827, %v853
      %v855 = vrot.slane %v822, %v854
      %v856 = vlaneseq
      %v857 = vshrl.u32 %v856, 7
      %v858 = vsub.s32 %v827, %v857
      %v859 = vrot.slane %v825, %v858
      %vm860 = vcmask 1041409
      %v861 = vsel %vm860, %v835, %v831
      %vm862 = vcmask 1042434
      %v863 = vsel %vm862, %v839, %v861
      %vm864 = vcmask 1043459
      %v865 = vsel %vm864, %v843, %v863
      %vm866 = vcmask 1044484
      %v867 = vsel %vm866, %v847, %v865
      %vm868 = vcmask 1045509
      %v869 = vsel %vm868, %v851, %v867
      %vm870 = vcmask 1046534
      %v871 = vsel %vm870, %v855, %v869
      %vm872 = vcmask 1047559
      %v873 = vsel %vm872, %v859, %v871
      %vm875 = vcmask 64512
      %v876 = vsel %vm875, %v873, -inf
      %877 = vmax.xlane.f32.xlu0 %v876
      %v878 = vpop.xlane.xlu0 %877
      %v880 = vlaneseq
      %v881 = vshrl.u32 %v880, 7
      %v882 = vsub.s32 0, %v881
      %v883 = vrot.slane %v878, %v882
      %v884 = vlaneseq
      %v885 = vshrl.u32 %v884, 7
      %v886 = vsub.s32 1, %v885
      %v887 = vrot.slane %v878, %v886
      %v888 = vlaneseq
      %v889 = vshrl.u32 %v888, 7
      %v890 = vsub.s32 2, %v889
      %v891 = vrot.slane %v878, %v890
      %v892 = vlaneseq
      %v893 = vshrl.u32 %v892, 7
      %v894 = vsub.s32 3, %v893
      %v895 = vrot.slane %v878, %v894
      %v896 = vlaneseq
      %v897 = vshrl.u32 %v896, 7
      %v898 = vsub.s32 4, %v897
      %v899 = vrot.slane %v878, %v898
      %v900 = vlaneseq
      %v901 = vshrl.u32 %v900, 7
      %v902 = vsub.s32 5, %v901
      %v903 = vrot.slane %v878, %v902
      %v904 = vlaneseq
      %v905 = vshrl.u32 %v904, 7
      %v906 = vsub.s32 6, %v905
      %v907 = vrot.slane %v878, %v906
      %v908 = vlaneseq
      %v909 = vshrl.u32 %v908, 7
      %v910 = vsub.s32 7, %v909
      %v911 = vrot.slane %v878, %v910
      %v920 = vsub.f32 %v786, %v883
      %v921 = vsub.f32 %v787, %v887
      %v922 = vsub.f32 %v788, %v891
      %v923 = vsub.f32 %v789, %v895
      %v924 = vsub.f32 %v790, %v899
      %v925 = vsub.f32 %v791, %v903
      %v926 = vsub.f32 %v792, %v907
      %v927 = vsub.f32 %v793, %v911
      %v928 = vmul.f32 %v920, 1.442695
      %v929 = vpow.pop %v928
      %v930 = vmul.f32 %v921, 1.442695
      %v931 = vpow.pop %v930
      %v932 = vmul.f32 %v922, 1.442695
      %v933 = vpow.pop %v932
      %v934 = vmul.f32 %v923, 1.442695
      %v935 = vpow.pop %v934
      %v936 = vmul.f32 %v924, 1.442695
      %v937 = vpow.pop %v936
      %v938 = vmul.f32 %v925, 1.442695
      %v939 = vpow.pop %v938
      %v940 = vmul.f32 %v926, 1.442695
      %v941 = vpow.pop %v940
      %v942 = vmul.f32 %v927, 1.442695
      %v943 = vpow.pop %v942
      %952 = vset.pattern.permute.xlu0 0
      %953 = vperm.xlu0 %952, %v929
      %v954 = vpop.permute.xlu0 %953
      %955 = vset.pattern.permute.xlu0 0
      %956 = vperm.xlu0 %955, %v931
      %v957 = vpop.permute.xlu0 %956
      %958 = vset.pattern.permute.xlu0 0
      %959 = vperm.xlu0 %958, %v933
      %v960 = vpop.permute.xlu0 %959
      %961 = vset.pattern.permute.xlu0 0
      %962 = vperm.xlu0 %961, %v935
      %v963 = vpop.permute.xlu0 %962
      %964 = vset.pattern.permute.xlu0 0
      %965 = vperm.xlu0 %964, %v937
      %v966 = vpop.permute.xlu0 %965
      %967 = vset.pattern.permute.xlu0 0
      %968 = vperm.xlu0 %967, %v939
      %v969 = vpop.permute.xlu0 %968
      %970 = vset.pattern.permute.xlu0 0
      %971 = vperm.xlu0 %970, %v941
      %v972 = vpop.permute.xlu0 %971
      %973 = vset.pattern.permute.xlu0 0
      %974 = vperm.xlu0 %973, %v943
      %v975 = vpop.permute.xlu0 %974
      %v976 = vlaneseq
      %v977 = vshrl.u32 %v976, 7
      %v978 = vsub.s32 %v827, %v977
      %v979 = vrot.slane %v954, %v978
      %v980 = vlaneseq
      %v981 = vshrl.u32 %v980, 7
      %v982 = vsub.s32 %v827, %v981
      %v983 = vrot.slane %v957, %v982
      %v984 = vlaneseq
      %v985 = vshrl.u32 %v984, 7
      %v986 = vsub.s32 %v827, %v985
      %v987 = vrot.slane %v960, %v986
      %v988 = vlaneseq
      %v989 = vshrl.u32 %v988, 7
      %v990 = vsub.s32 %v827, %v989
      %v991 = vrot.slane %v963, %v990
      %v992 = vlaneseq
      %v993 = vshrl.u32 %v992, 7
      %v994 = vsub.s32 %v827, %v993
      %v995 = vrot.slane %v966, %v994
      %v996 = vlaneseq
      %v997 = vshrl.u32 %v996, 7
      %v998 = vsub.s32 %v827, %v997
      %v999 = vrot.slane %v969, %v998
      %v1000 = vlaneseq
      %v1001 = vshrl.u32 %v1000, 7
      %v1002 = vsub.s32 %v827, %v1001
      %v1003 = vrot.slane %v972, %v1002
      %v1004 = vlaneseq
      %v1005 = vshrl.u32 %v1004, 7
      %v1006 = vsub.s32 %v827, %v1005
      %v1007 = vrot.slane %v975, %v1006
      %v1008 = vsel %vm860, %v983, %v979
      %v1009 = vsel %vm862, %v987, %v1008
      %v1010 = vsel %vm864, %v991, %v1009
      %v1011 = vsel %vm866, %v995, %v1010
      %v1012 = vsel %vm868, %v999, %v1011
      %v1013 = vsel %vm870, %v1003, %v1012
      %v1014 = vsel %vm872, %v1007, %v1013
      %v1016 = vsel %vm875, %v1014, 0.0
      %1017 = vadd.xlane.f32.xlu0 %v1016
      %v1018 = vpop.xlane.xlu0 %1017
      %v1019 = vrcp.pop %v1018
      %v1021 = vlaneseq
      %v1022 = vshrl.u32 %v1021, 7
      %v1023 = vsub.s32 0, %v1022
      %v1024 = vrot.slane %v1019, %v1023
      %v1025 = vlaneseq
      %v1026 = vshrl.u32 %v1025, 7
      %v1027 = vsub.s32 1, %v1026
      %v1028 = vrot.slane %v1019, %v1027
      %v1029 = vlaneseq
      %v1030 = vshrl.u32 %v1029, 7
      %v1031 = vsub.s32 2, %v1030
      %v1032 = vrot.slane %v1019, %v1031
      %v1033 = vlaneseq
      %v1034 = vshrl.u32 %v1033, 7
      %v1035 = vsub.s32 3, %v1034
      %v1036 = vrot.slane %v1019, %v1035
      %v1037 = vlaneseq
      %v1038 = vshrl.u32 %v1037, 7
      %v1039 = vsub.s32 4, %v1038
      %v1040 = vrot.slane %v1019, %v1039
      %v1041 = vlaneseq
      %v1042 = vshrl.u32 %v1041, 7
      %v1043 = vsub.s32 5, %v1042
      %v1044 = vrot.slane %v1019, %v1043
      %v1045 = vlaneseq
      %v1046 = vshrl.u32 %v1045, 7
      %v1047 = vsub.s32 6, %v1046
      %v1048 = vrot.slane %v1019, %v1047
      %v1049 = vlaneseq
      %v1050 = vshrl.u32 %v1049, 7
      %v1051 = vsub.s32 7, %v1050
      %v1052 = vrot.slane %v1019, %v1051
      %v1061 = vmul.f32 %v929, %v1024
      %v1062 = vmul.f32 %v931, %v1028
      %v1063 = vmul.f32 %v933, %v1032
      %v1064 = vmul.f32 %v935, %v1036
      %v1065 = vmul.f32 %v937, %v1040
      %v1066 = vmul.f32 %v939, %v1044
      %v1067 = vmul.f32 %v941, %v1048
      %v1068 = vmul.f32 %v943, %v1052
      %v1069 = vld [vmem:[#allocation10] sm:$0xff]
      %v1070 = vld [vmem:[#allocation10 + $0x8] sm:$0xff]
      %v1071 = vld [vmem:[#allocation10 + $0x10] sm:$0xff]
      %v1072 = vld [vmem:[#allocation10 + $0x18] sm:$0xff]
      %v1073 = vld [vmem:[#allocation10 + $0x20] sm:$0xff]
      %v1074 = vld [vmem:[#allocation10 + $0x28] sm:$0xff]
      %v1075 = vld [vmem:[#allocation10 + $0x30] sm:$0xff]
      %v1076 = vld [vmem:[#allocation10 + $0x38] sm:$0xff]
      %1078 = vset.pattern.permute.xlu0 0
      %1079 = vperm.xlu0 %1078, %v1061
      %v1080 = vpop.permute.xlu0 %1079
      %1083 = vset.pattern.permute.xlu0 0
      %1084 = vperm.xlu0 %1083, %v1062
      %v1085 = vpop.permute.xlu0 %1084
      %1088 = vset.pattern.permute.xlu0 0
      %1089 = vperm.xlu0 %1088, %v1063
      %v1090 = vpop.permute.xlu0 %1089
      %1093 = vset.pattern.permute.xlu0 0
      %1094 = vperm.xlu0 %1093, %v1064
      %v1095 = vpop.permute.xlu0 %1094
      %1098 = vset.pattern.permute.xlu0 0
      %1099 = vperm.xlu0 %1098, %v1065
      %v1100 = vpop.permute.xlu0 %1099
      %1103 = vset.pattern.permute.xlu0 0
      %1104 = vperm.xlu0 %1103, %v1066
      %v1105 = vpop.permute.xlu0 %1104
      %1108 = vset.pattern.permute.xlu0 0
      %1109 = vperm.xlu0 %1108, %v1067
      %v1110 = vpop.permute.xlu0 %1109
      %1113 = vset.pattern.permute.xlu0 0
      %1114 = vperm.xlu0 %1113, %v1068
      %v1115 = vpop.permute.xlu0 %1114
      %v1117 = vmul.f32 %v1080, %v1069
      %v1118 = vmul.f32 %v1085, %v1070
      %v1119 = vmul.f32 %v1090, %v1071
      %v1120 = vmul.f32 %v1095, %v1072
      %v1121 = vmul.f32 %v1100, %v1073
      %v1122 = vmul.f32 %v1105, %v1074
      %v1123 = vmul.f32 %v1110, %v1075
      %v1124 = vmul.f32 %v1115, %v1076
      %v1125 = vrot.slane %v1117, 4
      %v1126 = vadd.f32 %v1117, %v1125
      %v1127 = vrot.slane %v1126, 2
      %v1128 = vadd.f32 %v1126, %v1127
      %v1129 = vrot.slane %v1128, 1
      %v1130 = vadd.f32 %v1128, %v1129
      %v1131 = vrot.slane %v1118, 4
      %v1132 = vadd.f32 %v1118, %v1131
      %v1133 = vrot.slane %v1132, 2
      %v1134 = vadd.f32 %v1132, %v1133
      %v1135 = vrot.slane %v1134, 1
      %v1136 = vadd.f32 %v1134, %v1135
      %v1137 = vrot.slane %v1119, 4
      %v1138 = vadd.f32 %v1119, %v1137
      %v1139 = vrot.slane %v1138, 2
      %v1140 = vadd.f32 %v1138, %v1139
      %v1141 = vrot.slane %v1140, 1
      %v1142 = vadd.f32 %v1140, %v1141
      %v1143 = vrot.slane %v1120, 4
      %v1144 = vadd.f32 %v1120, %v1143
      %v1145 = vrot.slane %v1144, 2
      %v1146 = vadd.f32 %v1144, %v1145
      %v1147 = vrot.slane %v1146, 1
      %v1148 = vadd.f32 %v1146, %v1147
      %v1149 = vrot.slane %v1121, 4
      %v1150 = vadd.f32 %v1121, %v1149
      %v1151 = vrot.slane %v1150, 2
      %v1152 = vadd.f32 %v1150, %v1151
      %v1153 = vrot.slane %v1152, 1
      %v1154 = vadd.f32 %v1152, %v1153
      %v1155 = vrot.slane %v1122, 4
      %v1156 = vadd.f32 %v1122, %v1155
      %v1157 = vrot.slane %v1156, 2
      %v1158 = vadd.f32 %v1156, %v1157
      %v1159 = vrot.slane %v1158, 1
      %v1160 = vadd.f32 %v1158, %v1159
      %v1161 = vrot.slane %v1123, 4
      %v1162 = vadd.f32 %v1123, %v1161
      %v1163 = vrot.slane %v1162, 2
      %v1164 = vadd.f32 %v1162, %v1163
      %v1165 = vrot.slane %v1164, 1
      %v1166 = vadd.f32 %v1164, %v1165
      %v1167 = vrot.slane %v1124, 4
      %v1168 = vadd.f32 %v1124, %v1167
      %v1169 = vrot.slane %v1168, 2
      %v1170 = vadd.f32 %v1168, %v1169
      %v1171 = vrot.slane %v1170, 1
      %v1172 = vadd.f32 %v1170, %v1171
      %v1173 = vpack.c.bf16 %v444, %v444
      %v1174 = vld [vmem:[#allocation22] sm:$0xff]
      %v1175 = vld [vmem:[#allocation22 + $0x8] sm:$0xf]
      %v1176 = vld [vmem:[#allocation22 + $0xc] sm:$0xff]
      %v1177 = vld [vmem:[#allocation22 + $0x14] sm:$0xf]
      %v1178 = vld [vmem:[#allocation22 + $0x18] sm:$0xff]
      %v1179 = vld [vmem:[#allocation22 + $0x20] sm:$0xf]
      %v1180 = vld [vmem:[#allocation22 + $0x24] sm:$0xff]
      %v1181 = vld [vmem:[#allocation22 + $0x2c] sm:$0xf]
      %v1182 = vld [vmem:[#allocation22 + $0x30] sm:$0xff]
      %v1183 = vld [vmem:[#allocation22 + $0x38] sm:$0xf]
      %v1184 = vld [vmem:[#allocation22 + $0x3c] sm:$0xff]
      %v1185 = vld [vmem:[#allocation22 + $0x44] sm:$0xf]
      %v1186 = vld [vmem:[#allocation22 + $0x48] sm:$0xff]
      %v1187 = vld [vmem:[#allocation22 + $0x50] sm:$0xf]
      %v1188 = vld [vmem:[#allocation22 + $0x54] sm:$0xff]
      %v1189 = vld [vmem:[#allocation22 + $0x5c] sm:$0xf]
      %v1190 = vld [vmem:[#allocation22 + $0x60] sm:$0xff]
      %v1191 = vld [vmem:[#allocation22 + $0x68] sm:$0xf]
      %v1192 = vld [vmem:[#allocation22 + $0x6c] sm:$0xff]
      %v1193 = vld [vmem:[#allocation22 + $0x74] sm:$0xf]
      %v1194 = vld [vmem:[#allocation22 + $0x78] sm:$0xff]
      %v1195 = vld [vmem:[#allocation22 + $0x80] sm:$0xf]
      %v1196 = vld [vmem:[#allocation22 + $0x84] sm:$0xff]
      %v1197 = vld [vmem:[#allocation22 + $0x8c] sm:$0xf]
      %v1198 = vld [vmem:[#allocation22 + $0x90] sm:$0xff]
      %v1199 = vld [vmem:[#allocation22 + $0x98] sm:$0xf]
      %v1200 = vld [vmem:[#allocation22 + $0x9c] sm:$0xff]
      %v1201 = vld [vmem:[#allocation22 + $0xa4] sm:$0xf]
      %v1202 = vld [vmem:[#allocation22 + $0xa8] sm:$0xff]
      %v1203 = vld [vmem:[#allocation22 + $0xb0] sm:$0xf]
      %v1204 = vld [vmem:[#allocation22 + $0xb4] sm:$0xff]
      %v1205 = vld [vmem:[#allocation22 + $0xbc] sm:$0xf]
      %v1206 = vpack.c.bf16 %v1130, %v1130
      %v1207 = vpack.c.bf16 %v1136, %v1136
      %v1208 = vpack.c.bf16 %v1142, %v1142
      %v1209 = vpack.c.bf16 %v1148, %v1148
      %v1210 = vpack.c.bf16 %v1154, %v1154
      %v1211 = vpack.c.bf16 %v1160, %v1160
      %v1212 = vpack.c.bf16 %v1166, %v1166
      %v1213 = vpack.c.bf16 %v1172, %v1172
      %v1214 = vld [vmem:[#allocation24] sm:$0xff]
      %v1215 = vld [vmem:[#allocation24 + $0x8] sm:$0xf]
      %v1216 = vld [vmem:[#allocation24 + $0xc] sm:$0xff]
      %v1217 = vld [vmem:[#allocation24 + $0x14] sm:$0xf]
      %v1218 = vld [vmem:[#allocation24 + $0x18] sm:$0xff]
      %v1219 = vld [vmem:[#allocation24 + $0x20] sm:$0xf]
      %v1220 = vld [vmem:[#allocation24 + $0x24] sm:$0xff]
      %v1221 = vld [vmem:[#allocation24 + $0x2c] sm:$0xf]
      %v1222 = vld [vmem:[#allocation24 + $0x30] sm:$0xff]
      %v1223 = vld [vmem:[#allocation24 + $0x38] sm:$0xf]
      %v1224 = vld [vmem:[#allocation24 + $0x3c] sm:$0xff]
      %v1225 = vld [vmem:[#allocation24 + $0x44] sm:$0xf]
      %v1226 = vld [vmem:[#allocation24 + $0x48] sm:$0xff]
      %v1227 = vld [vmem:[#allocation24 + $0x50] sm:$0xf]
      %v1228 = vld [vmem:[#allocation24 + $0x54] sm:$0xff]
      %v1229 = vld [vmem:[#allocation24 + $0x5c] sm:$0xf]
      %v1230 = vld [vmem:[#allocation24 + $0x60] sm:$0xff]
      %v1231 = vld [vmem:[#allocation24 + $0x68] sm:$0xf]
      %v1232 = vld [vmem:[#allocation24 + $0x6c] sm:$0xff]
      %v1233 = vld [vmem:[#allocation24 + $0x74] sm:$0xf]
      %v1234 = vld [vmem:[#allocation24 + $0x78] sm:$0xff]
      %v1235 = vld [vmem:[#allocation24 + $0x80] sm:$0xf]
      %v1236 = vld [vmem:[#allocation24 + $0x84] sm:$0xff]
      %v1237 = vld [vmem:[#allocation24 + $0x8c] sm:$0xf]
      %v1238 = vld [vmem:[#allocation24 + $0x90] sm:$0xff]
      %v1239 = vld [vmem:[#allocation24 + $0x98] sm:$0xf]
      %v1240 = vld [vmem:[#allocation24 + $0x9c] sm:$0xff]
      %v1241 = vld [vmem:[#allocation24 + $0xa4] sm:$0xf]
      %v1242 = vld [vmem:[#allocation24 + $0xa8] sm:$0xff]
      %v1243 = vld [vmem:[#allocation24 + $0xb0] sm:$0xf]
      %v1244 = vld [vmem:[#allocation24 + $0xb4] sm:$0xff]
      %v1245 = vld [vmem:[#allocation24 + $0xbc] sm:$0xf]
      %v1254 = vunpack.c.l.b16 %v1206
      %v1255 = vunpack.c.l.b16 %v1207
      %v1256 = vunpack.c.l.b16 %v1208
      %v1257 = vunpack.c.l.b16 %v1209
      %v1258 = vunpack.c.l.b16 %v1210
      %v1259 = vunpack.c.l.b16 %v1211
      %v1260 = vunpack.c.l.b16 %v1212
      %v1261 = vunpack.c.l.b16 %v1213
      %v1262 = vsel %vm860, %v1255, %v1254
      %v1263 = vsel %vm862, %v1256, %v1262
      %v1264 = vsel %vm864, %v1257, %v1263
      %v1265 = vsel %vm866, %v1258, %v1264
      %v1266 = vsel %vm868, %v1259, %v1265
      %v1267 = vsel %vm870, %v1260, %v1266
      %v1268 = vsel %vm872, %v1261, %v1267
      %v1269 = vpack.c.b16 %v1268, %v1268
      %v1303 = vunpack.c.l.b16 %v1214
      %v1304 = vunpack.c.h.b16 %v1214
      %v1305 = vunpack.c.l.b16 %v1215
      %v1306 = vunpack.c.l.b16 %v1216
      %v1307 = vunpack.c.h.b16 %v1216
      %v1308 = vunpack.c.l.b16 %v1217
      %v1309 = vunpack.c.l.b16 %v1218
      %v1310 = vunpack.c.h.b16 %v1218
      %v1311 = vunpack.c.l.b16 %v1219
      %v1312 = vunpack.c.l.b16 %v1220
      %v1313 = vunpack.c.h.b16 %v1220
      %v1314 = vunpack.c.l.b16 %v1221
      %v1315 = vunpack.c.l.b16 %v1222
      %v1316 = vunpack.c.h.b16 %v1222
      %v1317 = vunpack.c.l.b16 %v1223
      %v1318 = vunpack.c.l.b16 %v1224
      %v1319 = vunpack.c.h.b16 %v1224
      %v1320 = vunpack.c.l.b16 %v1225
      %v1321 = vunpack.c.l.b16 %v1226
      %v1322 = vunpack.c.h.b16 %v1226
      %v1323 = vunpack.c.l.b16 %v1227
      %v1324 = vunpack.c.l.b16 %v1228
      %v1325 = vunpack.c.h.b16 %v1228
      %v1326 = vunpack.c.l.b16 %v1229
      %v1327 = vunpack.c.l.b16 %v1230
      %v1328 = vunpack.c.h.b16 %v1230
      %v1329 = vunpack.c.l.b16 %v1231
      %v1330 = vunpack.c.l.b16 %v1232
      %v1331 = vunpack.c.h.b16 %v1232
      %v1332 = vunpack.c.l.b16 %v1233
      %v1333 = vunpack.c.l.b16 %v1234
      %v1334 = vunpack.c.h.b16 %v1234
      %v1335 = vunpack.c.l.b16 %v1235
      %v1336 = vunpack.c.l.b16 %v1236
      %v1337 = vunpack.c.h.b16 %v1236
      %v1338 = vunpack.c.l.b16 %v1237
      %v1339 = vunpack.c.l.b16 %v1238
      %v1340 = vunpack.c.h.b16 %v1238
      %v1341 = vunpack.c.l.b16 %v1239
      %v1342 = vunpack.c.l.b16 %v1240
      %v1343 = vunpack.c.h.b16 %v1240
      %v1344 = vunpack.c.l.b16 %v1241
      %v1345 = vunpack.c.l.b16 %v1242
      %v1346 = vunpack.c.h.b16 %v1242
      %v1347 = vunpack.c.l.b16 %v1243
      %v1348 = vunpack.c.l.b16 %v1244
      %v1349 = vunpack.c.h.b16 %v1244
      %v1350 = vunpack.c.l.b16 %v1245
      %v1351 = vpack.c.b16 %v1306, %v1303
      %v1352 = vpack.c.b16 %v1307, %v1304
      %v1353 = vpack.c.b16 %v1308, %v1305
      %v1354 = vpack.c.b16 %v1312, %v1309
      %v1355 = vpack.c.b16 %v1313, %v1310
      %v1356 = vpack.c.b16 %v1314, %v1311
      %v1357 = vpack.c.b16 %v1318, %v1315
      %v1358 = vpack.c.b16 %v1319, %v1316
      %v1359 = vpack.c.b16 %v1320, %v1317
      %v1360 = vpack.c.b16 %v1324, %v1321
      %v1361 = vpack.c.b16 %v1325, %v1322
      %v1362 = vpack.c.b16 %v1326, %v1323
      %v1363 = vpack.c.b16 %v1330, %v1327
      %v1364 = vpack.c.b16 %v1331, %v1328
      %v1365 = vpack.c.b16 %v1332, %v1329
      %v1366 = vpack.c.b16 %v1336, %v1333
      %v1367 = vpack.c.b16 %v1337, %v1334
      %v1368 = vpack.c.b16 %v1338, %v1335
      %v1369 = vpack.c.b16 %v1342, %v1339
      %v1370 = vpack.c.b16 %v1343, %v1340
      %v1371 = vpack.c.b16 %v1344, %v1341
      %v1372 = vpack.c.b16 %v1348, %v1345
      %v1373 = vpack.c.b16 %v1349, %v1346
      %v1374 = vpack.c.b16 %v1350, %v1347
      %1399 = vmatprep.subr.bf16.mxu0 %v1352
      %1400 = vmatpush1.bf16.msra.mxu0 %v1351
      %1401 = vmatprep.subr.bf16.mxu0 %v1355
      %1402 = vmatpush1.bf16.msra.mxu0 %v1354
      %1403 = vmatprep.subr.bf16.mxu0 %v1358
      %1404 = vmatpush1.bf16.msra.mxu0 %v1357
      %1405 = vmatprep.subr.bf16.mxu0 %v1361
      %1406 = vmatpush1.bf16.msra.mxu0 %v1360
      %1407 = vmatprep.subr.bf16.mxu0 %v1364
      %1408 = vmatpush1.bf16.msra.mxu0 %v1363
      %1409 = vmatprep.subr.bf16.mxu0 %v1367
      %1410 = vmatpush1.bf16.msra.mxu0 %v1366
      %1411 = vmatprep.subr.bf16.mxu0 %v1370
      %1412 = vmatpush1.bf16.msra.mxu0 %v1369
      %1413 = vmatprep.subr.bf16.mxu0 %v1373
      %1414 = vmatpush1.bf16.msra.mxu0 %v1372
      %1415 = vmatprep.subr.bf16.mxu0 0
      %1416 = vmatpush1.bf16.msra.mxu0 0
      %1417 = vmatprep.subr.bf16.mxu0 0
      %1418 = vmatpush1.bf16.msra.mxu0 0
      %1419 = vmatprep.subr.bf16.mxu0 0
      %1420 = vmatpush1.bf16.msra.mxu0 0
      %1421 = vmatprep.subr.bf16.mxu0 0
      %1422 = vmatpush1.bf16.msra.mxu0 0
      %1423 = vmatprep.subr.bf16.mxu0 0
      %1424 = vmatpush1.bf16.msra.mxu0 0
      %1425 = vmatprep.subr.bf16.mxu0 0
      %1426 = vmatpush1.bf16.msra.mxu0 0
      %1427 = vmatprep.subr.bf16.mxu0 0
      %1428 = vmatpush1.bf16.msra.mxu0 0
      %1429 = vmatprep.subr.bf16.mxu0 0
      %1430 = vmatpush1.bf16.msra.mxu0 0
      %1431 = vmatprep.mubr.bf16.mxu0 0
      %1432 = vmatmul.mubr.bf16.gmra.mrb[0].mxu0 %v1269
      %v1433 = vpop.f32.mrb[0].mxu0
      %v1434 = vadd.f32 0.0, %v1433
      %v1435 = vpop.f32.mrb[0].mxu0
      %v1436 = vadd.f32 0.0, %v1435
      %v1437 = vpop.f32.mrb[0].mxu0
      %v1438 = vpop.f32.mrb[0].mxu0
      %1439 = vdwg.mxu0
      %1440 = vmatprep.subr.bf16.mxu0 0
      %1441 = vmatpush1.bf16.msra.mxu0 %v1353
      %1442 = vmatprep.subr.bf16.mxu0 0
      %1443 = vmatpush1.bf16.msra.mxu0 %v1356
      %1444 = vmatprep.subr.bf16.mxu0 0
      %1445 = vmatpush1.bf16.msra.mxu0 %v1359
      %1446 = vmatprep.subr.bf16.mxu0 0
      %1447 = vmatpush1.bf16.msra.mxu0 %v1362
      %1448 = vmatprep.subr.bf16.mxu0 0
      %1449 = vmatpush1.bf16.msra.mxu0 %v1365
      %1450 = vmatprep.subr.bf16.mxu0 0
      %1451 = vmatpush1.bf16.msra.mxu0 %v1368
      %1452 = vmatprep.subr.bf16.mxu0 0
      %1453 = vmatpush1.bf16.msra.mxu0 %v1371
      %1454 = vmatprep.subr.bf16.mxu0 0
      %1455 = vmatpush1.bf16.msra.mxu0 %v1374
      %1456 = vmatprep.subr.bf16.mxu0 0
      %1457 = vmatpush1.bf16.msra.mxu0 0
      %1458 = vmatprep.subr.bf16.mxu0 0
      %1459 = vmatpush1.bf16.msra.mxu0 0
      %1460 = vmatprep.subr.bf16.mxu0 0
      %1461 = vmatpush1.bf16.msra.mxu0 0
      %1462 = vmatprep.subr.bf16.mxu0 0
      %1463 = vmatpush1.bf16.msra.mxu0 0
      %1464 = vmatprep.subr.bf16.mxu0 0
      %1465 = vmatpush1.bf16.msra.mxu0 0
      %1466 = vmatprep.subr.bf16.mxu0 0
      %1467 = vmatpush1.bf16.msra.mxu0 0
      %1468 = vmatprep.subr.bf16.mxu0 0
      %1469 = vmatpush1.bf16.msra.mxu0 0
      %1470 = vmatprep.subr.bf16.mxu0 0
      %1471 = vmatpush1.bf16.msra.mxu0 0
      %1472 = vmatprep.mubr.bf16.mxu0 0
      %1473 = vmatmul.mubr.bf16.gmra.mrb[0].mxu0 %v1269
      %v1474 = vpop.f32.mrb[0].mxu0
      %v1475 = vadd.f32 0.0, %v1474
      %v1476 = vpop.f32.mrb[0].mxu0
      %v1477 = vpop.f32.mrb[0].mxu0
      %v1478 = vpop.f32.mrb[0].mxu0
      %1479 = vdwg.mxu0
      %v1512 = vunpack.c.l.b16 %v1174
      %v1513 = vunpack.c.h.b16 %v1174
      %v1514 = vunpack.c.l.b16 %v1175
      %v1515 = vunpack.c.l.b16 %v1176
      %v1516 = vunpack.c.h.b16 %v1176
      %v1517 = vunpack.c.l.b16 %v1177
      %v1518 = vunpack.c.l.b16 %v1178
      %v1519 = vunpack.c.h.b16 %v1178
      %v1520 = vunpack.c.l.b16 %v1179
      %v1521 = vunpack.c.l.b16 %v1180
      %v1522 = vunpack.c.h.b16 %v1180
      %v1523 = vunpack.c.l.b16 %v1181
      %v1524 = vunpack.c.l.b16 %v1182
      %v1525 = vunpack.c.h.b16 %v1182
      %v1526 = vunpack.c.l.b16 %v1183
      %v1527 = vunpack.c.l.b16 %v1184
      %v1528 = vunpack.c.h.b16 %v1184
      %v1529 = vunpack.c.l.b16 %v1185
      %v1530 = vunpack.c.l.b16 %v1186
      %v1531 = vunpack.c.h.b16 %v1186
      %v1532 = vunpack.c.l.b16 %v1187
      %v1533 = vunpack.c.l.b16 %v1188
      %v1534 = vunpack.c.h.b16 %v1188
      %v1535 = vunpack.c.l.b16 %v1189
      %v1536 = vunpack.c.l.b16 %v1190
      %v1537 = vunpack.c.h.b16 %v1190
      %v1538 = vunpack.c.l.b16 %v1191
      %v1539 = vunpack.c.l.b16 %v1192
      %v1540 = vunpack.c.h.b16 %v1192
      %v1541 = vunpack.c.l.b16 %v1193
      %v1542 = vunpack.c.l.b16 %v1194
      %v1543 = vunpack.c.h.b16 %v1194
      %v1544 = vunpack.c.l.b16 %v1195
      %v1545 = vunpack.c.l.b16 %v1196
      %v1546 = vunpack.c.h.b16 %v1196
      %v1547 = vunpack.c.l.b16 %v1197
      %v1548 = vunpack.c.l.b16 %v1198
      %v1549 = vunpack.c.h.b16 %v1198
      %v1550 = vunpack.c.l.b16 %v1199
      %v1551 = vunpack.c.l.b16 %v1200
      %v1552 = vunpack.c.h.b16 %v1200
      %v1553 = vunpack.c.l.b16 %v1201
      %v1554 = vunpack.c.l.b16 %v1202
      %v1555 = vunpack.c.h.b16 %v1202
      %v1556 = vunpack.c.l.b16 %v1203
      %v1557 = vunpack.c.l.b16 %v1204
      %v1558 = vunpack.c.h.b16 %v1204
      %v1559 = vunpack.c.l.b16 %v1205
      %v1560 = vpack.c.b16 %v1515, %v1512
      %v1561 = vpack.c.b16 %v1516, %v1513
      %v1562 = vpack.c.b16 %v1517, %v1514
      %v1563 = vpack.c.b16 %v1521, %v1518
      %v1564 = vpack.c.b16 %v1522, %v1519
      %v1565 = vpack.c.b16 %v1523, %v1520
      %v1566 = vpack.c.b16 %v1527, %v1524
      %v1567 = vpack.c.b16 %v1528, %v1525
      %v1568 = vpack.c.b16 %v1529, %v1526
      %v1569 = vpack.c.b16 %v1533, %v1530
      %v1570 = vpack.c.b16 %v1534, %v1531
      %v1571 = vpack.c.b16 %v1535, %v1532
      %v1572 = vpack.c.b16 %v1539, %v1536
      %v1573 = vpack.c.b16 %v1540, %v1537
      %v1574 = vpack.c.b16 %v1541, %v1538
      %v1575 = vpack.c.b16 %v1545, %v1542
      %v1576 = vpack.c.b16 %v1546, %v1543
      %v1577 = vpack.c.b16 %v1547, %v1544
      %v1578 = vpack.c.b16 %v1551, %v1548
      %v1579 = vpack.c.b16 %v1552, %v1549
      %v1580 = vpack.c.b16 %v1553, %v1550
      %v1581 = vpack.c.b16 %v1557, %v1554
      %v1582 = vpack.c.b16 %v1558, %v1555
      %v1583 = vpack.c.b16 %v1559, %v1556
      %1608 = vmatprep.subr.bf16.mxu0 %v1561
      %1609 = vmatpush1.bf16.msra.mxu0 %v1560
      %1610 = vmatprep.subr.bf16.mxu0 %v1564
      %1611 = vmatpush1.bf16.msra.mxu0 %v1563
      %1612 = vmatprep.subr.bf16.mxu0 %v1567
      %1613 = vmatpush1.bf16.msra.mxu0 %v1566
      %1614 = vmatprep.subr.bf16.mxu0 %v1570
      %1615 = vmatpush1.bf16.msra.mxu0 %v1569
      %1616 = vmatprep.subr.bf16.mxu0 %v1573
      %1617 = vmatpush1.bf16.msra.mxu0 %v1572
      %1618 = vmatprep.subr.bf16.mxu0 %v1576
      %1619 = vmatpush1.bf16.msra.mxu0 %v1575
      %1620 = vmatprep.subr.bf16.mxu0 %v1579
      %1621 = vmatpush1.bf16.msra.mxu0 %v1578
      %1622 = vmatprep.subr.bf16.mxu0 %v1582
      %1623 = vmatpush1.bf16.msra.mxu0 %v1581
      %1624 = vmatprep.subr.bf16.mxu0 0
      %1625 = vmatpush1.bf16.msra.mxu0 0
      %1626 = vmatprep.subr.bf16.mxu0 0
      %1627 = vmatpush1.bf16.msra.mxu0 0
      %1628 = vmatprep.subr.bf16.mxu0 0
      %1629 = vmatpush1.bf16.msra.mxu0 0
      %1630 = vmatprep.subr.bf16.mxu0 0
      %1631 = vmatpush1.bf16.msra.mxu0 0
      %1632 = vmatprep.subr.bf16.mxu0 0
      %1633 = vmatpush1.bf16.msra.mxu0 0
      %1634 = vmatprep.subr.bf16.mxu0 0
      %1635 = vmatpush1.bf16.msra.mxu0 0
      %1636 = vmatprep.subr.bf16.mxu0 0
      %1637 = vmatpush1.bf16.msra.mxu0 0
      %1638 = vmatprep.subr.bf16.mxu0 0
      %1639 = vmatpush1.bf16.msra.mxu0 0
      %1640 = vmatprep.mubr.bf16.mxu0 0
      %1641 = vmatmul.mubr.bf16.gmra.mrb[0].mxu0 %v1173
      %v1642 = vpop.f32.mrb[0].mxu0
      %v1643 = vadd.f32 %v1434, %v1642
      %v1644 = vpop.f32.mrb[0].mxu0
      %v1645 = vadd.f32 %v1436, %v1644
      %v1646 = vpop.f32.mrb[0].mxu0
      %v1647 = vpop.f32.mrb[0].mxu0
      %1648 = vdwg.mxu0
      %1649 = vmatprep.subr.bf16.mxu0 0
      %1650 = vmatpush1.bf16.msra.mxu0 %v1562
      %1651 = vmatprep.subr.bf16.mxu0 0
      %1652 = vmatpush1.bf16.msra.mxu0 %v1565
      %1653 = vmatprep.subr.bf16.mxu0 0
      %1654 = vmatpush1.bf16.msra.mxu0 %v1568
      %1655 = vmatprep.subr.bf16.mxu0 0
      %1656 = vmatpush1.bf16.msra.mxu0 %v1571
      %1657 = vmatprep.subr.bf16.mxu0 0
      %1658 = vmatpush1.bf16.msra.mxu0 %v1574
      %1659 = vmatprep.subr.bf16.mxu0 0
      %1660 = vmatpush1.bf16.msra.mxu0 %v1577
      %1661 = vmatprep.subr.bf16.mxu0 0
      %1662 = vmatpush1.bf16.msra.mxu0 %v1580
      %1663 = vmatprep.subr.bf16.mxu0 0
      %1664 = vmatpush1.bf16.msra.mxu0 %v1583
      %1665 = vmatprep.subr.bf16.mxu0 0
      %1666 = vmatpush1.bf16.msra.mxu0 0
      %1667 = vmatprep.subr.bf16.mxu0 0
      %1668 = vmatpush1.bf16.msra.mxu0 0
      %1669 = vmatprep.subr.bf16.mxu0 0
      %1670 = vmatpush1.bf16.msra.mxu0 0
      %1671 = vmatprep.subr.bf16.mxu0 0
      %1672 = vmatpush1.bf16.msra.mxu0 0
      %1673 = vmatprep.subr.bf16.mxu0 0
      %1674 = vmatpush1.bf16.msra.mxu0 0
      %1675 = vmatprep.subr.bf16.mxu0 0
      %1676 = vmatpush1.bf16.msra.mxu0 0
      %1677 = vmatprep.subr.bf16.mxu0 0
      %1678 = vmatpush1.bf16.msra.mxu0 0
      %1679 = vmatprep.subr.bf16.mxu0 0
      %1680 = vmatpush1.bf16.msra.mxu0 0
      %1681 = vmatprep.mubr.bf16.mxu0 0
      %1682 = vmatmul.mubr.bf16.gmra.mrb[0].mxu0 %v1173
      %v1683 = vpop.f32.mrb[0].mxu0
      %v1684 = vadd.f32 %v1475, %v1683
      %v1685 = vpop.f32.mrb[0].mxu0
      %v1686 = vpop.f32.mrb[0].mxu0
      %v1687 = vpop.f32.mrb[0].mxu0
      %1688 = vdwg.mxu0
      %v1689 = vld [vmem:[#allocation27] sm:$0x7]
      %v1691 = vlaneseq
      %v1692 = vshrl.u32 %v1691, 7
      %v1693 = vsub.s32 0, %v1692
      %v1694 = vrot.slane %v1689, %v1693
      %v1695 = vlaneseq
      %v1696 = vshrl.u32 %v1695, 7
      %v1697 = vsub.s32 1, %v1696
      %v1698 = vrot.slane %v1689, %v1697
      %v1699 = vlaneseq
      %v1700 = vshrl.u32 %v1699, 7
      %v1701 = vsub.s32 2, %v1700
      %v1702 = vrot.slane %v1689, %v1701
      %v1706 = vadd.f32 %v1643, %v1694
      %v1707 = vadd.f32 %v1645, %v1698
      %v1708 = vadd.f32 %v1684, %v1702
      %v1709 = vld [vmem:[#allocation25] sm:$0xff]
      %v1710 = vld [vmem:[#allocation25 + $0x8] sm:$0xf]
      %v1711 = vld [vmem:[#allocation25 + $0xc] sm:$0xff]
      %v1712 = vld [vmem:[#allocation25 + $0x14] sm:$0xf]
      %v1713 = vld [vmem:[#allocation25 + $0x18] sm:$0xff]
      %v1714 = vld [vmem:[#allocation25 + $0x20] sm:$0xf]
      %v1715 = vld [vmem:[#allocation25 + $0x24] sm:$0xff]
      %v1716 = vld [vmem:[#allocation25 + $0x2c] sm:$0xf]
      %v1717 = vld [vmem:[#allocation25 + $0x30] sm:$0xff]
      %v1718 = vld [vmem:[#allocation25 + $0x38] sm:$0xf]
      %v1719 = vld [vmem:[#allocation25 + $0x3c] sm:$0xff]
      %v1720 = vld [vmem:[#allocation25 + $0x44] sm:$0xf]
      %v1721 = vld [vmem:[#allocation25 + $0x48] sm:$0xff]
      %v1722 = vld [vmem:[#allocation25 + $0x50] sm:$0xf]
      %v1723 = vld [vmem:[#allocation25 + $0x54] sm:$0xff]
      %v1724 = vld [vmem:[#allocation25 + $0x5c] sm:$0xf]
      %v1725 = vld [vmem:[#allocation25 + $0x60] sm:$0xff]
      %v1726 = vld [vmem:[#allocation25 + $0x68] sm:$0xf]
      %v1727 = vld [vmem:[#allocation25 + $0x6c] sm:$0xff]
      %v1728 = vld [vmem:[#allocation25 + $0x74] sm:$0xf]
      %v1729 = vld [vmem:[#allocation25 + $0x78] sm:$0xff]
      %v1730 = vld [vmem:[#allocation25 + $0x80] sm:$0xf]
      %v1731 = vld [vmem:[#allocation25 + $0x84] sm:$0xff]
      %v1732 = vld [vmem:[#allocation25 + $0x8c] sm:$0xf]
      %v1733 = vld [vmem:[#allocation25 + $0x90] sm:$0xff]
      %v1734 = vld [vmem:[#allocation25 + $0x98] sm:$0xf]
      %v1735 = vld [vmem:[#allocation25 + $0x9c] sm:$0xff]
      %v1736 = vld [vmem:[#allocation25 + $0xa4] sm:$0xf]
      %v1737 = vld [vmem:[#allocation25 + $0xa8] sm:$0xff]
      %v1738 = vld [vmem:[#allocation25 + $0xb0] sm:$0xf]
      %v1739 = vld [vmem:[#allocation25 + $0xb4] sm:$0xff]
      %v1740 = vld [vmem:[#allocation25 + $0xbc] sm:$0xf]
      %v1741 = vld [vmem:[#allocation28] sm:$0x7]
      %v1743 = vlaneseq
      %v1744 = vshrl.u32 %v1743, 7
      %v1745 = vsub.s32 0, %v1744
      %v1746 = vrot.slane %v1741, %v1745
      %v1747 = vlaneseq
      %v1748 = vshrl.u32 %v1747, 7
      %v1749 = vsub.s32 1, %v1748
      %v1750 = vrot.slane %v1741, %v1749
      %v1751 = vlaneseq
      %v1752 = vshrl.u32 %v1751, 7
      %v1753 = vsub.s32 2, %v1752
      %v1754 = vrot.slane %v1741, %v1753
      %v1790 = vunpack.c.l.b16 %v1709
      %v1791 = vunpack.c.h.b16 %v1709
      %v1792 = vunpack.c.l.b16 %v1710
      %v1793 = vunpack.c.l.b16 %v1711
      %v1794 = vunpack.c.h.b16 %v1711
      %v1795 = vunpack.c.l.b16 %v1712
      %v1796 = vunpack.c.l.b16 %v1713
      %v1797 = vunpack.c.h.b16 %v1713
      %v1798 = vunpack.c.l.b16 %v1714
      %v1799 = vunpack.c.l.b16 %v1715
      %v1800 = vunpack.c.h.b16 %v1715
      %v1801 = vunpack.c.l.b16 %v1716
      %v1802 = vunpack.c.l.b16 %v1717
      %v1803 = vunpack.c.h.b16 %v1717
      %v1804 = vunpack.c.l.b16 %v1718
      %v1805 = vunpack.c.l.b16 %v1719
      %v1806 = vunpack.c.h.b16 %v1719
      %v1807 = vunpack.c.l.b16 %v1720
      %v1808 = vunpack.c.l.b16 %v1721
      %v1809 = vunpack.c.h.b16 %v1721
      %v1810 = vunpack.c.l.b16 %v1722
      %v1811 = vunpack.c.l.b16 %v1723
      %v1812 = vunpack.c.h.b16 %v1723
      %v1813 = vunpack.c.l.b16 %v1724
      %v1814 = vunpack.c.l.b16 %v1725
      %v1815 = vunpack.c.h.b16 %v1725
      %v1816 = vunpack.c.l.b16 %v1726
      %v1817 = vunpack.c.l.b16 %v1727
      %v1818 = vunpack.c.h.b16 %v1727
      %v1819 = vunpack.c.l.b16 %v1728
      %v1820 = vunpack.c.l.b16 %v1729
      %v1821 = vunpack.c.h.b16 %v1729
      %v1822 = vunpack.c.l.b16 %v1730
      %v1823 = vunpack.c.l.b16 %v1731
      %v1824 = vunpack.c.h.b16 %v1731
      %v1825 = vunpack.c.l.b16 %v1732
      %v1826 = vunpack.c.l.b16 %v1733
      %v1827 = vunpack.c.h.b16 %v1733
      %v1828 = vunpack.c.l.b16 %v1734
      %v1829 = vunpack.c.l.b16 %v1735
      %v1830 = vunpack.c.h.b16 %v1735
      %v1831 = vunpack.c.l.b16 %v1736
      %v1832 = vunpack.c.l.b16 %v1737
      %v1833 = vunpack.c.h.b16 %v1737
      %v1834 = vunpack.c.l.b16 %v1738
      %v1835 = vunpack.c.l.b16 %v1739
      %v1836 = vunpack.c.h.b16 %v1739
      %v1837 = vunpack.c.l.b16 %v1740
      %v1838 = vpack.c.b16 %v1793, %v1790
      %v1839 = vpack.c.b16 %v1794, %v1791
      %v1840 = vpack.c.b16 %v1795, %v1792
      %v1841 = vpack.c.b16 %v1799, %v1796
      %v1842 = vpack.c.b16 %v1800, %v1797
      %v1843 = vpack.c.b16 %v1801, %v1798
      %v1844 = vpack.c.b16 %v1805, %v1802
      %v1845 = vpack.c.b16 %v1806, %v1803
      %v1846 = vpack.c.b16 %v1807, %v1804
      %v1847 = vpack.c.b16 %v1811, %v1808
      %v1848 = vpack.c.b16 %v1812, %v1809
      %v1849 = vpack.c.b16 %v1813, %v1810
      %v1850 = vpack.c.b16 %v1817, %v1814
      %v1851 = vpack.c.b16 %v1818, %v1815
      %v1852 = vpack.c.b16 %v1819, %v1816
      %v1853 = vpack.c.b16 %v1823, %v1820
      %v1854 = vpack.c.b16 %v1824, %v1821
      %v1855 = vpack.c.b16 %v1825, %v1822
      %v1856 = vpack.c.b16 %v1829, %v1826
      %v1857 = vpack.c.b16 %v1830, %v1827
      %v1858 = vpack.c.b16 %v1831, %v1828
      %v1859 = vpack.c.b16 %v1835, %v1832
      %v1860 = vpack.c.b16 %v1836, %v1833
      %v1861 = vpack.c.b16 %v1837, %v1834
      %1886 = vmatprep.subr.bf16.mxu0 %v1839
      %1887 = vmatpush1.bf16.msra.mxu0 %v1838
      %1888 = vmatprep.subr.bf16.mxu0 %v1842
      %1889 = vmatpush1.bf16.msra.mxu0 %v1841
      %1890 = vmatprep.subr.bf16.mxu0 %v1845
      %1891 = vmatpush1.bf16.msra.mxu0 %v1844
      %1892 = vmatprep.subr.bf16.mxu0 %v1848
      %1893 = vmatpush1.bf16.msra.mxu0 %v1847
      %1894 = vmatprep.subr.bf16.mxu0 %v1851
      %1895 = vmatpush1.bf16.msra.mxu0 %v1850
      %1896 = vmatprep.subr.bf16.mxu0 %v1854
      %1897 = vmatpush1.bf16.msra.mxu0 %v1853
      %1898 = vmatprep.subr.bf16.mxu0 %v1857
      %1899 = vmatpush1.bf16.msra.mxu0 %v1856
      %1900 = vmatprep.subr.bf16.mxu0 %v1860
      %1901 = vmatpush1.bf16.msra.mxu0 %v1859
      %1902 = vmatprep.subr.bf16.mxu0 0
      %1903 = vmatpush1.bf16.msra.mxu0 0
      %1904 = vmatprep.subr.bf16.mxu0 0
      %1905 = vmatpush1.bf16.msra.mxu0 0
      %1906 = vmatprep.subr.bf16.mxu0 0
      %1907 = vmatpush1.bf16.msra.mxu0 0
      %1908 = vmatprep.subr.bf16.mxu0 0
      %1909 = vmatpush1.bf16.msra.mxu0 0
      %1910 = vmatprep.subr.bf16.mxu0 0
      %1911 = vmatpush1.bf16.msra.mxu0 0
      %1912 = vmatprep.subr.bf16.mxu0 0
      %1913 = vmatpush1.bf16.msra.mxu0 0
      %1914 = vmatprep.subr.bf16.mxu0 0
      %1915 = vmatpush1.bf16.msra.mxu0 0
      %1916 = vmatprep.subr.bf16.mxu0 0
      %1917 = vmatpush1.bf16.msra.mxu0 0
      %1918 = vmatprep.mubr.bf16.mxu0 0
      %1919 = vmatmul.mubr.bf16.gmra.mrb[0].mxu0 %v445
      %v1920 = vpop.f32.mrb[0].mxu0
      %v1921 = vadd.f32 %v1746, %v1920
      %v1922 = vpop.f32.mrb[0].mxu0
      %v1923 = vadd.f32 %v1750, %v1922
      %v1924 = vpop.f32.mrb[0].mxu0
      %v1925 = vpop.f32.mrb[0].mxu0
      %1926 = vdwg.mxu0
      %1927 = vmatprep.subr.bf16.mxu0 0
      %1928 = vmatpush1.bf16.msra.mxu0 %v1840
      %1929 = vmatprep.subr.bf16.mxu0 0
      %1930 = vmatpush1.bf16.msra.mxu0 %v1843
      %1931 = vmatprep.subr.bf16.mxu0 0
      %1932 = vmatpush1.bf16.msra.mxu0 %v1846
      %1933 = vmatprep.subr.bf16.mxu0 0
      %1934 = vmatpush1.bf16.msra.mxu0 %v1849
      %1935 = vmatprep.subr.bf16.mxu0 0
      %1936 = vmatpush1.bf16.msra.mxu0 %v1852
      %1937 = vmatprep.subr.bf16.mxu0 0
      %1938 = vmatpush1.bf16.msra.mxu0 %v1855
      %1939 = vmatprep.subr.bf16.mxu0 0
      %1940 = vmatpush1.bf16.msra.mxu0 %v1858
      %1941 = vmatprep.subr.bf16.mxu0 0
      %1942 = vmatpush1.bf16.msra.mxu0 %v1861
      %1943 = vmatprep.subr.bf16.mxu0 0
      %1944 = vmatpush1.bf16.msra.mxu0 0
      %1945 = vmatprep.subr.bf16.mxu0 0
      %1946 = vmatpush1.bf16.msra.mxu0 0
      %1947 = vmatprep.subr.bf16.mxu0 0
      %1948 = vmatpush1.bf16.msra.mxu0 0
      %1949 = vmatprep.subr.bf16.mxu0 0
      %1950 = vmatpush1.bf16.msra.mxu0 0
      %1951 = vmatprep.subr.bf16.mxu0 0
      %1952 = vmatpush1.bf16.msra.mxu0 0
      %1953 = vmatprep.subr.bf16.mxu0 0
      %1954 = vmatpush1.bf16.msra.mxu0 0
      %1955 = vmatprep.subr.bf16.mxu0 0
      %1956 = vmatpush1.bf16.msra.mxu0 0
      %1957 = vmatprep.subr.bf16.mxu0 0
      %1958 = vmatpush1.bf16.msra.mxu0 0
      %1959 = vmatprep.mubr.bf16.mxu0 0
      %1960 = vmatmul.mubr.bf16.gmra.mrb[0].mxu0 %v445
      %v1961 = vpop.f32.mrb[0].mxu0
      %v1962 = vadd.f32 %v1754, %v1961
      %v1963 = vpop.f32.mrb[0].mxu0
      %v1964 = vpop.f32.mrb[0].mxu0
      %v1965 = vpop.f32.mrb[0].mxu0
      %1966 = vdwg.mxu0
      %v1967 = vadd.f32 %v1706, %v1921
      %v1968 = vxor.u32 %v1967, 2147483648
      %v1969 = vmul.f32 %v1968, 1.442695
      %v1970 = vpow.pop %v1969
      %v1971 = vadd.f32 %v1970, 1.0
      %v1972 = vrcp.pop %v1971
      %v1973 = vmul.f32 1.0, %v1972
      %v1974 = vadd.f32 %v1707, %v1923
      %v1975 = vxor.u32 %v1974, 2147483648
      %v1976 = vmul.f32 %v1975, 1.442695
      %v1977 = vpow.pop %v1976
      %v1978 = vadd.f32 %v1977, 1.0
      %v1979 = vrcp.pop %v1978
      %v1980 = vmul.f32 1.0, %v1979
      %v1981 = vmul.f32 %v1973, %v1962
      %v1982 = vadd.f32 %v1708, %v1981
      %v1983 = vtanh.pop %v1982
      %v1984 = vsub.f32 1.0, %v1980
      %v1985 = vmul.f32 %v1984, %v1983
      %v1986 = vmul.f32 %v1980, %v443
      %v1987 = vadd.f32 %v1985, %v1986
      %1988 = vst [vmem:[#allocation2] sm:$0xff] %v1987
      %v1989 = vpack.c.bf16 %v1987, %v1987
      %v1990 = vld [vmem:[#allocation30] sm:$0xf]
      %v1991 = vld [vmem:[#allocation30 + $0x4] sm:$0xf]
      %v1992 = vld [vmem:[#allocation30 + $0x8] sm:$0xf]
      %v1993 = vld [vmem:[#allocation30 + $0xc] sm:$0xf]
      %v1994 = vld [vmem:[#allocation30 + $0x10] sm:$0xf]
      %v1995 = vld [vmem:[#allocation30 + $0x14] sm:$0xf]
      %v1996 = vld [vmem:[#allocation30 + $0x18] sm:$0xf]
      %v1997 = vld [vmem:[#allocation30 + $0x1c] sm:$0xf]
      %v1998 = vld [vmem:[#allocation30 + $0x20] sm:$0xf]
      %v1999 = vld [vmem:[#allocation30 + $0x24] sm:$0xf]
      %v2000 = vld [vmem:[#allocation30 + $0x28] sm:$0xf]
      %v2001 = vld [vmem:[#allocation30 + $0x2c] sm:$0xf]
      %v2002 = vld [vmem:[#allocation30 + $0x30] sm:$0xf]
      %v2003 = vld [vmem:[#allocation30 + $0x34] sm:$0xf]
      %v2004 = vld [vmem:[#allocation30 + $0x38] sm:$0xf]
      %v2005 = vld [vmem:[#allocation30 + $0x3c] sm:$0xf]
      %v2006 = vld [vmem:[#allocation31] sm:$0x1]
      %v2008 = vlaneseq
      %v2009 = vshrl.u32 %v2008, 7
      %v2010 = vsub.s32 0, %v2009
      %v2011 = vrot.slane %v2006, %v2010
      %v2029 = vunpack.c.l.b16 %v1990
      %v2030 = vunpack.c.l.b16 %v1991
      %v2031 = vunpack.c.l.b16 %v1992
      %v2032 = vunpack.c.l.b16 %v1993
      %v2033 = vunpack.c.l.b16 %v1994
      %v2034 = vunpack.c.l.b16 %v1995
      %v2035 = vunpack.c.l.b16 %v1996
      %v2036 = vunpack.c.l.b16 %v1997
      %v2037 = vunpack.c.l.b16 %v1998
      %v2038 = vunpack.c.l.b16 %v1999
      %v2039 = vunpack.c.l.b16 %v2000
      %v2040 = vunpack.c.l.b16 %v2001
      %v2041 = vunpack.c.l.b16 %v2002
      %v2042 = vunpack.c.l.b16 %v2003
      %v2043 = vunpack.c.l.b16 %v2004
      %v2044 = vunpack.c.l.b16 %v2005
      %v2045 = vpack.c.b16 %v2030, %v2029
      %v2046 = vpack.c.b16 %v2032, %v2031
      %v2047 = vpack.c.b16 %v2034, %v2033
      %v2048 = vpack.c.b16 %v2036, %v2035
      %v2049 = vpack.c.b16 %v2038, %v2037
      %v2050 = vpack.c.b16 %v2040, %v2039
      %v2051 = vpack.c.b16 %v2042, %v2041
      %v2052 = vpack.c.b16 %v2044, %v2043
      %2061 = vmatprep.subr.bf16.mxu0 0
      %2062 = vmatpush1.bf16.msra.mxu0 %v2045
      %2063 = vmatprep.subr.bf16.mxu0 0
      %2064 = vmatpush1.bf16.msra.mxu0 %v2046
      %2065 = vmatprep.subr.bf16.mxu0 0
      %2066 = vmatpush1.bf16.msra.mxu0 %v2047
      %2067 = vmatprep.subr.bf16.mxu0 0
      %2068 = vmatpush1.bf16.msra.mxu0 %v2048
      %2069 = vmatprep.subr.bf16.mxu0 0
      %2070 = vmatpush1.bf16.msra.mxu0 %v2049
      %2071 = vmatprep.subr.bf16.mxu0 0
      %2072 = vmatpush1.bf16.msra.mxu0 %v2050
      %2073 = vmatprep.subr.bf16.mxu0 0
      %2074 = vmatpush1.bf16.msra.mxu0 %v2051
      %2075 = vmatprep.subr.bf16.mxu0 0
      %2076 = vmatpush1.bf16.msra.mxu0 %v2052
      %2077 = vmatprep.subr.bf16.mxu0 0
      %2078 = vmatpush1.bf16.msra.mxu0 0
      %2079 = vmatprep.subr.bf16.mxu0 0
      %2080 = vmatpush1.bf16.msra.mxu0 0
      %2081 = vmatprep.subr.bf16.mxu0 0
      %2082 = vmatpush1.bf16.msra.mxu0 0
      %2083 = vmatprep.subr.bf16.mxu0 0
      %2084 = vmatpush1.bf16.msra.mxu0 0
      %2085 = vmatprep.subr.bf16.mxu0 0
      %2086 = vmatpush1.bf16.msra.mxu0 0
      %2087 = vmatprep.subr.bf16.mxu0 0
      %2088 = vmatpush1.bf16.msra.mxu0 0
      %2089 = vmatprep.subr.bf16.mxu0 0
      %2090 = vmatpush1.bf16.msra.mxu0 0
      %2091 = vmatprep.subr.bf16.mxu0 0
      %2092 = vmatpush1.bf16.msra.mxu0 0
      %2093 = vmatprep.mubr.bf16.mxu0 0
      %2094 = vmatmul.mubr.bf16.gmra.mrb[0].mxu0 %v1989
      %v2095 = vpop.f32.mrb[0].mxu0
      %v2096 = vadd.f32 %v2011, %v2095
      %v2097 = vpop.f32.mrb[0].mxu0
      %v2098 = vpop.f32.mrb[0].mxu0
      %v2099 = vpop.f32.mrb[0].mxu0
      %2100 = vdwg.mxu0
      %2101 = vmax.xlane.f32.xlu0 %v2096
      %v2102 = vpop.xlane.xlu0 %2101
      %v2103 = vsub.f32 %v2096, %v2102
      %v2104 = vmul.f32 %v2103, 1.442695
      %v2105 = vpow.pop %v2104
      %2106 = vadd.xlane.f32.xlu0 %v2105
      %v2107 = vpop.xlane.xlu0 %2106
      %v2108 = vlog2.pop %v2107
      %v2109 = vmul.f32 %v2108, 0.6931472
      %v2110 = vadd.f32 %v2102, %v2109
      %v2111 = vsub.f32 %v2096, %v2110
      %s2112 = smul.u32 %s438, 8
      %s2113 = scalar_lea.vmem [#allocation5], %s2112
      %2114 = vst [vmem:[%s2113] sm:$0xff] %v2111
      %vm2115 = vcmp.ge.f32.partialorder %v2096, %v2102
      %v2116 = vsel %vm2115, %v827, 128
      %v2117 = vand.u32 %v2116, 65535
      %v2118 = vshra.s32 %v2116, 16
      %v2119 = vcvt.s32.f32 %v2117
      %v2120 = vcvt.s32.f32 %v2118
      %2121 = vmin.xlane.f32.xlu0 %v2120
      %v2122 = vpop.xlane.xlu0 %2121
      %vm2123 = vcmp.eq.f32.partialorder %v2120, %v2122
      %v2124 = vsel %vm2123, %v2119, inf
      %2125 = vmin.xlane.f32.xlu0 %v2124
      %v2126 = vpop.xlane.xlu0 %2125
      %v2127 = vcvt.f32.s32 %v2126
      %v2128 = vcvt.f32.s32 %v2122
      %v2129 = vshll.u32 %v2128, 16
      %v2130 = vadd.s32 %v2129, %v2127
      %vm2131 = vcmp.eq.s32.totalorder %v827, %v2130
      %v2132 = vsel %vm2131, 1, 0
      %v2133 = vcvt.s32.f32 %v2132
      %v2134 = vpack.c.bf16 %v2133, %v2133
      %v2135 = vld [vmem:[#allocation13] sm:$0xf]
      %v2136 = vld [vmem:[#allocation13 + $0x4] sm:$0xf]
      %v2137 = vld [vmem:[#allocation13 + $0x8] sm:$0xf]
      %v2138 = vld [vmem:[#allocation13 + $0xc] sm:$0xf]
      %v2139 = vld [vmem:[#allocation13 + $0x10] sm:$0xf]
      %v2140 = vld [vmem:[#allocation13 + $0x14] sm:$0xf]
      %v2141 = vld [vmem:[#allocation13 + $0x18] sm:$0xf]
      %v2142 = vld [vmem:[#allocation13 + $0x1c] sm:$0xf]
      %v2143 = vld [vmem:[#allocation13 + $0x20] sm:$0xf]
      %v2144 = vld [vmem:[#allocation13 + $0x24] sm:$0xf]
      %v2145 = vld [vmem:[#allocation13 + $0x28] sm:$0xf]
      %v2146 = vld [vmem:[#allocation13 + $0x2c] sm:$0xf]
      %v2147 = vld [vmem:[#allocation13 + $0x30] sm:$0xf]
      %v2148 = vld [vmem:[#allocation13 + $0x34] sm:$0xf]
      %v2149 = vld [vmem:[#allocation13 + $0x38] sm:$0xf]
      %v2150 = vld [vmem:[#allocation13 + $0x3c] sm:$0xf]
      %v2167 = vunpack.c.l.b16 %v2135
      %v2168 = vunpack.c.l.b16 %v2136
      %v2169 = vunpack.c.l.b16 %v2137
      %v2170 = vunpack.c.l.b16 %v2138
      %v2171 = vunpack.c.l.b16 %v2139
      %v2172 = vunpack.c.l.b16 %v2140
      %v2173 = vunpack.c.l.b16 %v2141
      %v2174 = vunpack.c.l.b16 %v2142
      %v2175 = vunpack.c.l.b16 %v2143
      %v2176 = vunpack.c.l.b16 %v2144
      %v2177 = vunpack.c.l.b16 %v2145
      %v2178 = vunpack.c.l.b16 %v2146
      %v2179 = vunpack.c.l.b16 %v2147
      %v2180 = vunpack.c.l.b16 %v2148
      %v2181 = vunpack.c.l.b16 %v2149
      %v2182 = vunpack.c.l.b16 %v2150
      %v2183 = vpack.c.b16 %v2168, %v2167
      %v2184 = vpack.c.b16 %v2170, %v2169
      %v2185 = vpack.c.b16 %v2172, %v2171
      %v2186 = vpack.c.b16 %v2174, %v2173
      %v2187 = vpack.c.b16 %v2176, %v2175
      %v2188 = vpack.c.b16 %v2178, %v2177
      %v2189 = vpack.c.b16 %v2180, %v2179
      %v2190 = vpack.c.b16 %v2182, %v2181
      %2199 = vmatprep.subr.bf16.mxu0 0
      %2200 = vmatpush1.bf16.msra.mxu0 %v2183
      %2201 = vmatprep.subr.bf16.mxu0 0
      %2202 = vmatpush1.bf16.msra.mxu0 %v2184
      %2203 = vmatprep.subr.bf16.mxu0 0
      %2204 = vmatpush1.bf16.msra.mxu0 %v2185
      %2205 = vmatprep.subr.bf16.mxu0 0
      %2206 = vmatpush1.bf16.msra.mxu0 %v2186
      %2207 = vmatprep.subr.bf16.mxu0 0
      %2208 = vmatpush1.bf16.msra.mxu0 %v2187
      %2209 = vmatprep.subr.bf16.mxu0 0
      %2210 = vmatpush1.bf16.msra.mxu0 %v2188
      %2211 = vmatprep.subr.bf16.mxu0 0
      %2212 = vmatpush1.bf16.msra.mxu0 %v2189
      %2213 = vmatprep.subr.bf16.mxu0 0
      %2214 = vmatpush1.bf16.msra.mxu0 %v2190
      %2215 = vmatprep.subr.bf16.mxu0 0
      %2216 = vmatpush1.bf16.msra.mxu0 0
      %2217 = vmatprep.subr.bf16.mxu0 0
      %2218 = vmatpush1.bf16.msra.mxu0 0
      %2219 = vmatprep.subr.bf16.mxu0 0
      %2220 = vmatpush1.bf16.msra.mxu0 0
      %2221 = vmatprep.subr.bf16.mxu0 0
      %2222 = vmatpush1.bf16.msra.mxu0 0
      %2223 = vmatprep.subr.bf16.mxu0 0
      %2224 = vmatpush1.bf16.msra.mxu0 0
      %2225 = vmatprep.subr.bf16.mxu0 0
      %2226 = vmatpush1.bf16.msra.mxu0 0
      %2227 = vmatprep.subr.bf16.mxu0 0
      %2228 = vmatpush1.bf16.msra.mxu0 0
      %2229 = vmatprep.subr.bf16.mxu0 0
      %2230 = vmatpush1.bf16.msra.mxu0 0
      %2231 = vmatprep.mubr.bf16.mxu0 0
      %2232 = vmatmul.mubr.bf16.gmra.mrb[0].mxu0 %v2134
      %v2233 = vpop.f32.mrb[0].mxu0
      %v2234 = vadd.f32 0.0, %v2233
      %v2235 = vpop.f32.mrb[0].mxu0
      %v2236 = vpop.f32.mrb[0].mxu0
      %v2237 = vpop.f32.mrb[0].mxu0
      %2238 = vdwg.mxu0
      %2239 = vst [vmem:[#allocation3] sm:$0xff] %v2234
    $region138: #{tpu_custom_call.1} parent=1 // loop_footer
      %s442 = sadd.s32 1, %s438
    $region139: #{tpu_custom_call.1} parent=1 // loop_footer_branch
      %437 = sbr.rel target = $region135
    $region140: #{tpu_custom_call.1} parent=1 // loop_exit
      _
    %v2240 = vld [vmem:[#allocation5] sm:$0xff]
    %2241 = vst [vmem:[#allocation33] sm:$0xff] %v2240
    %s2242 = scalar_lea.vmem [#allocation5], 8
    %v2243 = vld [vmem:[%s2242] sm:$0xff]
    %2244 = vst [vmem:[#allocation33 + $0x8] sm:$0xff] %v2243
    %s2245 = scalar_lea.vmem [#allocation5], 16
    %v2246 = vld [vmem:[%s2245] sm:$0xff]
    %2247 = vst [vmem:[#allocation33 + $0x10] sm:$0xff] %v2246
    %s2248 = scalar_lea.vmem [#allocation5], 24
    %v2249 = vld [vmem:[%s2248] sm:$0xff]
    %2250 = vst [vmem:[#allocation33 + $0x18] sm:$0xff] %v2249
    %s2251 = scalar_lea.vmem [#allocation5], 32
    %v2252 = vld [vmem:[%s2251] sm:$0xff]
    %2253 = vst [vmem:[#allocation33 + $0x20] sm:$0xff] %v2252
    %s2254 = scalar_lea.vmem [#allocation5], 40
    %v2255 = vld [vmem:[%s2254] sm:$0xff]
    %2256 = vst [vmem:[#allocation33 + $0x28] sm:$0xff] %v2255
    %s2257 = scalar_lea.vmem [#allocation5], 48
    %v2258 = vld [vmem:[%s2257] sm:$0xff]
    %2259 = vst [vmem:[#allocation33 + $0x30] sm:$0xff] %v2258
    %s2260 = scalar_lea.vmem [#allocation5], 56
    %v2261 = vld [vmem:[%s2260] sm:$0xff]
    %2262 = vst [vmem:[#allocation33 + $0x38] sm:$0xff] %v2261
    %v2263 = vld [vmem:[#allocation2] sm:$0xff]
    %2264 = vst [vmem:[#allocation34] sm:$0xff] %v2263
    // Predicated region
    $region141: #{tpu_custom_call.1} parent=1 // pred_check
      _
    $region142: #{tpu_custom_call.1} parent=1 // pred_check_branch
      %2266 = sbr.rel (0) target = $region144
    $region143: #{tpu_custom_call.1} parent=1 // pred_region
      %s2268 = ssub.s32 1024, 1024
      %2269 = vsyncadd [#allocation9], %s2268
      %s2271 = sshll.u32 [#allocation33], 4
      %s2272 = int_to_ptr.vmem [resolvable:$true] %s2271
      %2274 = dma.vmem_to_hbm [thread:$0]  %s2272, 1024, %s17, [#allocation9]
    $region144: #{tpu_custom_call.1} parent=1 // pred_fallthru
      _
    // Predicated region
    $region145: #{tpu_custom_call.1} parent=1 // pred_check
      _
    $region146: #{tpu_custom_call.1} parent=1 // pred_check_branch
      %2276 = sbr.rel (0) target = $region148
    $region147: #{tpu_custom_call.1} parent=1 // pred_region
      %s2278 = ssub.s32 128, 128
      %2279 = vsyncadd [#allocation35], %s2278
      %s2281 = sshll.u32 [#allocation34], 4
      %s2282 = int_to_ptr.vmem [resolvable:$true] %s2281
      %2284 = dma.vmem_to_hbm [thread:$0]  %s2282, 128, %s18, [#allocation35]
    $region148: #{tpu_custom_call.1} parent=1 // pred_fallthru
      _
    // Predicated region
    $region149: #{tpu_custom_call.1} parent=1 // pred_check
      _
    $region150: #{tpu_custom_call.1} parent=1 // pred_check_branch
      %2286 = sbr.rel (0) target = $region152
    $region151: #{tpu_custom_call.1} parent=1 // pred_region
      %2287 = dma.done [#allocation9], 1024
    $region152: #{tpu_custom_call.1} parent=1 // pred_fallthru
      _
    // Predicated region
    $region153: #{tpu_custom_call.1} parent=1 // pred_check
      _
    $region154: #{tpu_custom_call.1} parent=1 // pred_check_branch
      %2289 = sbr.rel (0) target = $region156
    $region155: #{tpu_custom_call.1} parent=1 // pred_region
      %2290 = dma.done [#allocation35], 128
    $region156: #{tpu_custom_call.1} parent=1 // pred_fallthru
      _
    %2291 = vsyncpa [#allocation8], 1
    %2292 = vsyncpa [#allocation11], 1
    %2293 = vsyncpa [#allocation14], 1
    %2294 = vsyncpa [#allocation17], 1
    %2295 = vsyncpa [#allocation20], 1
    %2296 = vsyncpa [#allocation23], 1
    %2297 = vsyncpa [#allocation26], 1
    %2298 = vsyncpa [#allocation29], 1
    %2299 = vsyncpa [#allocation32], 1
    %2300 = vsyncpa [#allocation9], 1
    %2301 = vsyncpa [#allocation35], 1

</llo_original>
